<compile_context>
chip_gen: v7x
topology: tpu7x:2x2x1
jax: 0.10.0
libtpu: 0.0.40
codegen_flags: <defaults>
</compile_context>

<pallas_src>
import math
import numpy as np
import jax
import jax.numpy as jnp
from jax.experimental import pallas as pl
from jax.experimental.pallas import tpu as pltpu

# ---- model hyper-parameters (small, consistent with BertSelfAttention) ----
BATCH = 2
SEQ = 8          # opt.max_seq_len
HIDDEN = 32      # config.hidden_size
NUM_HEADS = 4    # config.num_attention_heads
HEAD_DIM = HIDDEN // NUM_HEADS


def _self_attention_kernel(x_ref, wb_ref, o_ref):
    """Single-invocation kernel over the whole (B, S, H) input.

    x_ref  : (B, S, H)    input activations (VMEM)
    wb_ref : (H + 1, 3H)  rows 0..H-1 = [Wq*scale | Wk | Wv], row H = biases
    o_ref  : (B, S, H)    output = tanh(attention context)
    """
    B, S, H = x_ref.shape
    d = HEAD_DIM

    # Fused QKV projection for all (batch, seq) rows at once:
    # one MXU matmul + one broadcast bias add.
    wb = wb_ref[...]                                                  # (H+1, 3H)
    w = wb[:H, :]                                                     # (H, 3H)
    b = wb[H:H + 1, :]                                                # (1, 3H)
    x2 = x_ref[...].reshape(B * S, H)                                 # (B*S, H)
    qkv = jnp.dot(x2, w, preferred_element_type=jnp.float32) + b      # (B*S, 3H)
    qkv = qkv.reshape(B, S, 3 * H)                                    # (B, S, 3H)

    # 1/sqrt(d) is already folded into the query weight / bias on the wrapper
    # side, so no score scaling is needed here.  The reference attention mask
    # is all zeros -> no-op add, omitted.
    ctx_heads = []
    for h in range(NUM_HEADS):                                        # static loop
        lo = h * d
        qh = qkv[:, :, lo:lo + d]                                     # (B, S, d)
        kh = qkv[:, :, H + lo:H + lo + d]                             # (B, S, d)
        vh = qkv[:, :, 2 * H + lo:2 * H + lo + d]                     # (B, S, d)

        # Scores batched over the batch dim (single dot_general per head).
        s = jnp.einsum("bqd,bkd->bqk", qh, kh,
                       preferred_element_type=jnp.float32)            # (B, S, S)
        s = s - jnp.max(s, axis=-1, keepdims=True)                    # stable softmax
        p = jnp.exp(s)
        p = p * pl.reciprocal(jnp.sum(p, axis=-1, keepdims=True), approx=True)
        # TODO(synk): BertSelfAttention applies dropout to `p` in training mode;
        # eval-mode (identity) is implemented here.

        ctx_heads.append(jnp.einsum("bqk,bkd->bqd", p, vh,
                                    preferred_element_type=jnp.float32))

    # Re-assemble heads in registers and emit full-tile stores.
    ctx = jnp.concatenate(ctx_heads, axis=-1)                         # (B, S, H)
    o_ref[...] = jnp.tanh(ctx).astype(o_ref.dtype)


def self_attention(x, wq, wk, wv, bq, bk, bv):
    B, S, H = x.shape
    scale = 1.0 / math.sqrt(HEAD_DIM)

    # Fuse the three projections, fold the attention scale into Wq / bq, and
    # append the fused bias as one extra row -> a single parameter DMA.
    wqkv = jnp.concatenate([wq * scale, wk, wv], axis=1)              # (H, 3H)
    bqkv = jnp.concatenate([bq * scale, bk, bv]).reshape(1, 3 * H)    # (1, 3H)
    wb = jnp.concatenate([wqkv, bqkv], axis=0)                        # (H+1, 3H)

    # Total resident data is ~20 KB: whole arrays live in VMEM, no grid needed.
    return pl.pallas_call(
        _self_attention_kernel,
        out_shape=jax.ShapeDtypeStruct((B, S, H), x.dtype),
        in_specs=[
            pl.BlockSpec(memory_space=pltpu.MemorySpace.VMEM),        # x
            pl.BlockSpec(memory_space=pltpu.MemorySpace.VMEM),        # W|b fused
        ],
        out_specs=pl.BlockSpec(memory_space=pltpu.MemorySpace.VMEM),
    )(x, wb)


def _reference(x, wq, wk, wv, bq, bk, bv):
    """Plain-JAX reference of BertSelfAttention + tanh (zero mask, no dropout)."""
    B, S, H = x.shape
    d = HEAD_DIM
    q = x @ wq + bq
    k = x @ wk + bk
    v = x @ wv + bv

    def split(t):  # (B, S, H) -> (B, nh, S, d)
        return t.reshape(B, S, NUM_HEADS, d).transpose(0, 2, 1, 3)

    qh, kh, vh = split(q), split(k), split(v)
    s = jnp.einsum("bhqd,bhkd->bhqk", qh, kh) / math.sqrt(d)
    p = jax.nn.softmax(s, axis=-1)
    ctx = jnp.einsum("bhqk,bhkd->bhqd", p, vh)
    ctx = ctx.transpose(0, 2, 1, 3).reshape(B, S, H)
    return jnp.tanh(ctx)


if __name__ == "__main__":
    key = jax.random.PRNGKey(0)
    k_x, k_wq, k_wk, k_wv, k_bq, k_bk, k_bv = jax.random.split(key, 7)

    x = jax.random.normal(k_x, (BATCH, SEQ, HIDDEN), dtype=jnp.float32)
    # Deterministic parameter init (shapes per BertSelfAttention: H x H + H bias).
    wq = jax.random.normal(k_wq, (HIDDEN, HIDDEN), dtype=jnp.float32) * 0.05
    wk = jax.random.normal(k_wk, (HIDDEN, HIDDEN), dtype=jnp.float32) * 0.05
    wv = jax.random.normal(k_wv, (HIDDEN, HIDDEN), dtype=jnp.float32) * 0.05
    bq = jax.random.normal(k_bq, (HIDDEN,), dtype=jnp.float32) * 0.01
    bk = jax.random.normal(k_bk, (HIDDEN,), dtype=jnp.float32) * 0.01
    bv = jax.random.normal(k_bv, (HIDDEN,), dtype=jnp.float32) * 0.01

    out = self_attention(x, wq, wk, wv, bq, bk, bv)
    out = jax.block_until_ready(out)

    ref = _reference(x, wq, wk, wv, bq, bk, bv)
    # Tolerance loosened slightly vs. exact softmax because the kernel uses the
    # EUP approximate reciprocal (pl.reciprocal(approx=True)) for the denominator.
    np.testing.assert_allclose(np.asarray(out), np.asarray(ref),
                               rtol=2e-3, atol=2e-3)
    print("KERNEL_OK")
</pallas_src>

<mosaic_0001>
module attributes {stable_mosaic.version = 11 : i64} {
  func.func @_self_attention_kernel(%arg0: memref<2x8x32xf32, #tpu.memory_space<vmem>>, %arg1: memref<33x96xf32, #tpu.memory_space<vmem>>, %arg2: memref<2x8x32xf32, #tpu.memory_space<vmem>>) attributes {dimension_semantics = [], scalar_prefetch = 0 : i64, scratch_operands = 0 : i64, tpu.core_type = #tpu.core_type<tc>} {
    %c0 = arith.constant 0 : index
    %c0_0 = arith.constant 0 : index
    %0 = vector.load %arg1[%c0, %c0_0] : memref<33x96xf32, #tpu.memory_space<vmem>>, vector<33x96xf32>
    %1 = vector.extract_strided_slice %0 {offsets = [0, 0], sizes = [32, 96], strides = [1, 1]} : vector<33x96xf32> to vector<32x96xf32>
    %2 = vector.extract_strided_slice %0 {offsets = [32, 0], sizes = [1, 96], strides = [1, 1]} : vector<33x96xf32> to vector<1x96xf32>
    %c0_1 = arith.constant 0 : index
    %c0_2 = arith.constant 0 : index
    %c0_3 = arith.constant 0 : index
    %3 = vector.load %arg0[%c0_1, %c0_2, %c0_3] : memref<2x8x32xf32, #tpu.memory_space<vmem>>, vector<2x8x32xf32>
    %4 = vector.shape_cast %3 : vector<2x8x32xf32> to vector<16x32xf32>
    %cst = arith.constant dense<0.000000e+00> : vector<16x96xf32>
    %5 = tpu.matmul %4, %1, %cst {dimension_numbers = #tpu.dot_dimension_numbers<[1], [0], [0], [1], [0, 0, 1, 1], [], []>} : vector<16x32xf32>, vector<32x96xf32>, vector<16x96xf32> -> vector<16x96xf32>
    %6 = vector.broadcast %2 : vector<1x96xf32> to vector<16x96xf32>
    %7 = arith.addf %5, %6 : vector<16x96xf32>
    %8 = vector.shape_cast %7 : vector<16x96xf32> to vector<2x8x96xf32>
    %9 = vector.extract_strided_slice %8 {offsets = [0, 0, 0], sizes = [2, 8, 8], strides = [1, 1, 1]} : vector<2x8x96xf32> to vector<2x8x8xf32>
    %10 = vector.extract_strided_slice %8 {offsets = [0, 0, 32], sizes = [2, 8, 8], strides = [1, 1, 1]} : vector<2x8x96xf32> to vector<2x8x8xf32>
    %11 = vector.extract_strided_slice %8 {offsets = [0, 0, 64], sizes = [2, 8, 8], strides = [1, 1, 1]} : vector<2x8x96xf32> to vector<2x8x8xf32>
    "tpu.trace_start"() <{level = 10 : i32, message = "bqd,bkd->bqk"}> : () -> ()
    %cst_4 = arith.constant dense<0.000000e+00> : vector<2x8x8xf32>
    %12 = tpu.matmul %9, %10, %cst_4 {dimension_numbers = #tpu.dot_dimension_numbers<[2], [2], [1], [1], [0, 0, 0, 1, 1, 1], [0], [0]>} : vector<2x8x8xf32>, vector<2x8x8xf32>, vector<2x8x8xf32> -> vector<2x8x8xf32>
    "tpu.trace_stop"() : () -> ()
    %cst_5 = arith.constant dense<0xFF800000> : vector<2x8xf32>
    %13 = vector.multi_reduction <maximumf>, %12, %cst_5 [2] : vector<2x8x8xf32> to vector<2x8xf32>
    %14 = vector.shape_cast %13 : vector<2x8xf32> to vector<2x8x1xf32>
    %15 = vector.broadcast %14 : vector<2x8x1xf32> to vector<2x8x8xf32>
    %16 = arith.subf %12, %15 : vector<2x8x8xf32>
    %17 = math.exp %16 : vector<2x8x8xf32>
    %cst_6 = arith.constant dense<0.000000e+00> : vector<2x8xf32>
    %18 = vector.multi_reduction <add>, %17, %cst_6 [2] : vector<2x8x8xf32> to vector<2x8xf32>
    %19 = vector.shape_cast %18 : vector<2x8xf32> to vector<2x8x1xf32>
    %20 = tpu.reciprocal %19 {approx = true} : vector<2x8x1xf32> -> vector<2x8x1xf32>
    %21 = vector.broadcast %20 : vector<2x8x1xf32> to vector<2x8x8xf32>
    %22 = arith.mulf %17, %21 : vector<2x8x8xf32>
    "tpu.trace_start"() <{level = 10 : i32, message = "bqk,bkd->bqd"}> : () -> ()
    %cst_7 = arith.constant dense<0.000000e+00> : vector<2x8x8xf32>
    %23 = tpu.matmul %22, %11, %cst_7 {dimension_numbers = #tpu.dot_dimension_numbers<[2], [1], [1], [2], [0, 0, 0, 1, 1, 2], [0], [0]>} : vector<2x8x8xf32>, vector<2x8x8xf32>, vector<2x8x8xf32> -> vector<2x8x8xf32>
    "tpu.trace_stop"() : () -> ()
    %24 = vector.extract_strided_slice %8 {offsets = [0, 0, 8], sizes = [2, 8, 8], strides = [1, 1, 1]} : vector<2x8x96xf32> to vector<2x8x8xf32>
    %25 = vector.extract_strided_slice %8 {offsets = [0, 0, 40], sizes = [2, 8, 8], strides = [1, 1, 1]} : vector<2x8x96xf32> to vector<2x8x8xf32>
    %26 = vector.extract_strided_slice %8 {offsets = [0, 0, 72], sizes = [2, 8, 8], strides = [1, 1, 1]} : vector<2x8x96xf32> to vector<2x8x8xf32>
    "tpu.trace_start"() <{level = 10 : i32, message = "bqd,bkd->bqk"}> : () -> ()
    %cst_8 = arith.constant dense<0.000000e+00> : vector<2x8x8xf32>
    %27 = tpu.matmul %24, %25, %cst_8 {dimension_numbers = #tpu.dot_dimension_numbers<[2], [2], [1], [1], [0, 0, 0, 1, 1, 1], [0], [0]>} : vector<2x8x8xf32>, vector<2x8x8xf32>, vector<2x8x8xf32> -> vector<2x8x8xf32>
    "tpu.trace_stop"() : () -> ()
    %cst_9 = arith.constant dense<0xFF800000> : vector<2x8xf32>
    %28 = vector.multi_reduction <maximumf>, %27, %cst_9 [2] : vector<2x8x8xf32> to vector<2x8xf32>
    %29 = vector.shape_cast %28 : vector<2x8xf32> to vector<2x8x1xf32>
    %30 = vector.broadcast %29 : vector<2x8x1xf32> to vector<2x8x8xf32>
    %31 = arith.subf %27, %30 : vector<2x8x8xf32>
    %32 = math.exp %31 : vector<2x8x8xf32>
    %cst_10 = arith.constant dense<0.000000e+00> : vector<2x8xf32>
    %33 = vector.multi_reduction <add>, %32, %cst_10 [2] : vector<2x8x8xf32> to vector<2x8xf32>
    %34 = vector.shape_cast %33 : vector<2x8xf32> to vector<2x8x1xf32>
    %35 = tpu.reciprocal %34 {approx = true} : vector<2x8x1xf32> -> vector<2x8x1xf32>
    %36 = vector.broadcast %35 : vector<2x8x1xf32> to vector<2x8x8xf32>
    %37 = arith.mulf %32, %36 : vector<2x8x8xf32>
    "tpu.trace_start"() <{level = 10 : i32, message = "bqk,bkd->bqd"}> : () -> ()
    %cst_11 = arith.constant dense<0.000000e+00> : vector<2x8x8xf32>
    %38 = tpu.matmul %37, %26, %cst_11 {dimension_numbers = #tpu.dot_dimension_numbers<[2], [1], [1], [2], [0, 0, 0, 1, 1, 2], [0], [0]>} : vector<2x8x8xf32>, vector<2x8x8xf32>, vector<2x8x8xf32> -> vector<2x8x8xf32>
    "tpu.trace_stop"() : () -> ()
    %39 = vector.extract_strided_slice %8 {offsets = [0, 0, 16], sizes = [2, 8, 8], strides = [1, 1, 1]} : vector<2x8x96xf32> to vector<2x8x8xf32>
    %40 = vector.extract_strided_slice %8 {offsets = [0, 0, 48], sizes = [2, 8, 8], strides = [1, 1, 1]} : vector<2x8x96xf32> to vector<2x8x8xf32>
    %41 = vector.extract_strided_slice %8 {offsets = [0, 0, 80], sizes = [2, 8, 8], strides = [1, 1, 1]} : vector<2x8x96xf32> to vector<2x8x8xf32>
    "tpu.trace_start"() <{level = 10 : i32, message = "bqd,bkd->bqk"}> : () -> ()
    %cst_12 = arith.constant dense<0.000000e+00> : vector<2x8x8xf32>
    %42 = tpu.matmul %39, %40, %cst_12 {dimension_numbers = #tpu.dot_dimension_numbers<[2], [2], [1], [1], [0, 0, 0, 1, 1, 1], [0], [0]>} : vector<2x8x8xf32>, vector<2x8x8xf32>, vector<2x8x8xf32> -> vector<2x8x8xf32>
    "tpu.trace_stop"() : () -> ()
    %cst_13 = arith.constant dense<0xFF800000> : vector<2x8xf32>
    %43 = vector.multi_reduction <maximumf>, %42, %cst_13 [2] : vector<2x8x8xf32> to vector<2x8xf32>
    %44 = vector.shape_cast %43 : vector<2x8xf32> to vector<2x8x1xf32>
    %45 = vector.broadcast %44 : vector<2x8x1xf32> to vector<2x8x8xf32>
    %46 = arith.subf %42, %45 : vector<2x8x8xf32>
    %47 = math.exp %46 : vector<2x8x8xf32>
    %cst_14 = arith.constant dense<0.000000e+00> : vector<2x8xf32>
    %48 = vector.multi_reduction <add>, %47, %cst_14 [2] : vector<2x8x8xf32> to vector<2x8xf32>
    %49 = vector.shape_cast %48 : vector<2x8xf32> to vector<2x8x1xf32>
    %50 = tpu.reciprocal %49 {approx = true} : vector<2x8x1xf32> -> vector<2x8x1xf32>
    %51 = vector.broadcast %50 : vector<2x8x1xf32> to vector<2x8x8xf32>
    %52 = arith.mulf %47, %51 : vector<2x8x8xf32>
    "tpu.trace_start"() <{level = 10 : i32, message = "bqk,bkd->bqd"}> : () -> ()
    %cst_15 = arith.constant dense<0.000000e+00> : vector<2x8x8xf32>
    %53 = tpu.matmul %52, %41, %cst_15 {dimension_numbers = #tpu.dot_dimension_numbers<[2], [1], [1], [2], [0, 0, 0, 1, 1, 2], [0], [0]>} : vector<2x8x8xf32>, vector<2x8x8xf32>, vector<2x8x8xf32> -> vector<2x8x8xf32>
    "tpu.trace_stop"() : () -> ()
    %54 = vector.extract_strided_slice %8 {offsets = [0, 0, 24], sizes = [2, 8, 8], strides = [1, 1, 1]} : vector<2x8x96xf32> to vector<2x8x8xf32>
    %55 = vector.extract_strided_slice %8 {offsets = [0, 0, 56], sizes = [2, 8, 8], strides = [1, 1, 1]} : vector<2x8x96xf32> to vector<2x8x8xf32>
    %56 = vector.extract_strided_slice %8 {offsets = [0, 0, 88], sizes = [2, 8, 8], strides = [1, 1, 1]} : vector<2x8x96xf32> to vector<2x8x8xf32>
    "tpu.trace_start"() <{level = 10 : i32, message = "bqd,bkd->bqk"}> : () -> ()
    %cst_16 = arith.constant dense<0.000000e+00> : vector<2x8x8xf32>
    %57 = tpu.matmul %54, %55, %cst_16 {dimension_numbers = #tpu.dot_dimension_numbers<[2], [2], [1], [1], [0, 0, 0, 1, 1, 1], [0], [0]>} : vector<2x8x8xf32>, vector<2x8x8xf32>, vector<2x8x8xf32> -> vector<2x8x8xf32>
    "tpu.trace_stop"() : () -> ()
    %cst_17 = arith.constant dense<0xFF800000> : vector<2x8xf32>
    %58 = vector.multi_reduction <maximumf>, %57, %cst_17 [2] : vector<2x8x8xf32> to vector<2x8xf32>
    %59 = vector.shape_cast %58 : vector<2x8xf32> to vector<2x8x1xf32>
    %60 = vector.broadcast %59 : vector<2x8x1xf32> to vector<2x8x8xf32>
    %61 = arith.subf %57, %60 : vector<2x8x8xf32>
    %62 = math.exp %61 : vector<2x8x8xf32>
    %cst_18 = arith.constant dense<0.000000e+00> : vector<2x8xf32>
    %63 = vector.multi_reduction <add>, %62, %cst_18 [2] : vector<2x8x8xf32> to vector<2x8xf32>
    %64 = vector.shape_cast %63 : vector<2x8xf32> to vector<2x8x1xf32>
    %65 = tpu.reciprocal %64 {approx = true} : vector<2x8x1xf32> -> vector<2x8x1xf32>
    %66 = vector.broadcast %65 : vector<2x8x1xf32> to vector<2x8x8xf32>
    %67 = arith.mulf %62, %66 : vector<2x8x8xf32>
    "tpu.trace_start"() <{level = 10 : i32, message = "bqk,bkd->bqd"}> : () -> ()
    %cst_19 = arith.constant dense<0.000000e+00> : vector<2x8x8xf32>
    %68 = tpu.matmul %67, %56, %cst_19 {dimension_numbers = #tpu.dot_dimension_numbers<[2], [1], [1], [2], [0, 0, 0, 1, 1, 2], [0], [0]>} : vector<2x8x8xf32>, vector<2x8x8xf32>, vector<2x8x8xf32> -> vector<2x8x8xf32>
    "tpu.trace_stop"() : () -> ()
    %69 = tpu.concatenate %23, %38, %53, %68 in 2 : vector<2x8x8xf32>, vector<2x8x8xf32>, vector<2x8x8xf32>, vector<2x8x8xf32> -> vector<2x8x32xf32>
    %70 = math.tanh %69 : vector<2x8x32xf32>
    %c0_20 = arith.constant 0 : index
    %c0_21 = arith.constant 0 : index
    %c0_22 = arith.constant 0 : index
    %71 = vector.load %arg2[%c0_20, %c0_21, %c0_22] : memref<2x8x32xf32, #tpu.memory_space<vmem>>, vector<2x8x32xf32>
    tpu.vector_store %arg2[%c0_20, %c0_21, %c0_22], %70 {strides = array<i32>} : memref<2x8x32xf32, #tpu.memory_space<vmem>>, vector<2x8x32xf32>,
    return
  }
}

</mosaic_0001>

<llo_original>
// kernel: tpu_custom_call.1
$region0: #{tpu_custom_call.1}
  #allocation0 [shape = 'u32[]', space=smem, size = 0x4, offset = 0x4, fixed_abs, tag = 'smem constant byte address 0x4 - core index']
  #allocation1 [shape = 'u32[144,128]{1,0:T(1,128)}', space=vmem, size = 0x12000, scoped, tag = 'internal scratch']
  %s0 = inlined_call_operand.hbm [shape: f32[2,8,32], index: 0, kind: input, shape index: {}]
  %s1 = inlined_call_operand.hbm [shape: f32[33,96], index: 1, kind: input, shape index: {}]
  %s2 = inlined_call_operand.hbm [shape: f32[2,8,32], index: 2, kind: output, shape index: {}]
  %s3 = sld [smem:[#allocation0]]
  $region26: #{tpu_custom_call.1} parent=0
    _
  %s5 = ssub.s32 1, %s3
  %s6 = scalar_select 0, %s5, %s3
  $region1: #{tpu_custom_call.1} parent=0
    #allocation2 [shape = 'u8[8192]{0}', space=vmem, size = 0x2000, scoped, tag = 'input window, operand 0, single buffered']
    #allocation3 [shape = 's32[1]{0}', space=sflag, size = 0x4, scoped, tag = 'scoped memory for tpu_custom_call.1']
    #allocation4 [shape = 's32[1]{0}', space=sflag, size = 0x4, scoped, tag = 'scoped memory for tpu_custom_call.1']
    #allocation5 [shape = 'u8[20480]{0}', space=vmem, size = 0x5000, scoped, tag = 'input window, operand 1, single buffered']
    #allocation6 [shape = 's32[1]{0}', space=sflag, size = 0x4, scoped, tag = 'scoped memory for tpu_custom_call.1']
    #allocation7 [shape = 'u8[8192]{0}', space=vmem, size = 0x2000, scoped, tag = 'output window, operand 0, single buffered']
    %7 = vsyncpa [#allocation3], 0
    %8 = vsyncpa [#allocation6], 0
    %9 = vsyncpa [#allocation4], 0
    // Predicated region
    $region2: #{tpu_custom_call.1} parent=1 // pred_check
      _
    $region3: #{tpu_custom_call.1} parent=1 // pred_check_branch
      %11 = sbr.rel (0) target = $region5
    $region4: #{tpu_custom_call.1} parent=1 // pred_region
      %s13 = ssub.s32 256, 256
      %14 = vsyncadd [#allocation3], %s13
      %s15 = sshll.u32 [#allocation2], 4
      %s16 = int_to_ptr.vmem [resolvable:$true] %s15
      %21 = dma.hbm_to_vmem [thread:$0]  %s0, 256, %s16, [#allocation3], 128, 128, 8
    $region5: #{tpu_custom_call.1} parent=1 // pred_fallthru
      _
    // Predicated region
    $region6: #{tpu_custom_call.1} parent=1 // pred_check
      _
    $region7: #{tpu_custom_call.1} parent=1 // pred_check_branch
      %23 = sbr.rel (0) target = $region9
    $region8: #{tpu_custom_call.1} parent=1 // pred_region
      %s25 = ssub.s32 640, 640
      %26 = vsyncadd [#allocation6], %s25
      %s27 = sshll.u32 [#allocation5], 4
      %s28 = int_to_ptr.vmem [resolvable:$true] %s27
      %33 = dma.hbm_to_vmem [thread:$0]  %s1, 640, %s28, [#allocation6], 128, 128, 8
    $region9: #{tpu_custom_call.1} parent=1 // pred_fallthru
      _
    // Predicated region
    $region10: #{tpu_custom_call.1} parent=1 // pred_check
      _
    $region11: #{tpu_custom_call.1} parent=1 // pred_check_branch
      %35 = sbr.rel (0) target = $region13
    $region12: #{tpu_custom_call.1} parent=1 // pred_region
      %36 = dma.done [#allocation3], 256
    $region13: #{tpu_custom_call.1} parent=1 // pred_fallthru
      _
    // Predicated region
    $region14: #{tpu_custom_call.1} parent=1 // pred_check
      _
    $region15: #{tpu_custom_call.1} parent=1 // pred_check_branch
      %38 = sbr.rel (0) target = $region17
    $region16: #{tpu_custom_call.1} parent=1 // pred_region
      %39 = dma.done [#allocation6], 640
    $region17: #{tpu_custom_call.1} parent=1 // pred_fallthru
      _
    %v40 = vld [vmem:[#allocation5] sm:$0xff]
    %v41 = vld [vmem:[#allocation5 + $0x8] sm:$0xff]
    %v42 = vld [vmem:[#allocation5 + $0x10] sm:$0xff]
    %v43 = vld [vmem:[#allocation5 + $0x18] sm:$0xff]
    %v44 = vld [vmem:[#allocation5 + $0x20] sm:$0x1]
    %v45 = vld [vmem:[#allocation2] sm:$0xff]
    %v46 = vld [vmem:[#allocation2 + $0x8] sm:$0xff]
    %v47 = vlaneseq
    %v48 = vshrl.u32 %v47, 7
    %v49 = vsub.s32 0, %v48
    %v50 = vrot.slane %v44, %v49
    %vm51 = vcmask 261120
    %v53 = vsel %vm51, %v45, 0
    %v56 = vsel %vm51, %v46, 0
    %58 = vmatprep.subr.mxu0 0.0
    %59 = vmatpush1.msra.mxu0 %v40
    %60 = vmatprep.subr.mxu0 0.0
    %61 = vmatpush1.msra.mxu0 %v41
    %62 = vmatprep.subr.mxu0 0.0
    %63 = vmatpush1.msra.mxu0 %v42
    %64 = vmatprep.subr.mxu0 0.0
    %65 = vmatpush1.msra.mxu0 %v43
    %66 = vmatprep.subr.mxu0 0.0
    %67 = vmatpush1.msra.mxu0 0.0
    %68 = vmatprep.subr.mxu0 0.0
    %69 = vmatpush1.msra.mxu0 0.0
    %70 = vmatprep.subr.mxu0 0.0
    %71 = vmatpush1.msra.mxu0 0.0
    %72 = vmatprep.subr.mxu0 0.0
    %73 = vmatpush1.msra.mxu0 0.0
    %74 = vmatprep.subr.mxu0 0.0
    %75 = vmatpush1.msra.mxu0 0.0
    %76 = vmatprep.subr.mxu0 0.0
    %77 = vmatpush1.msra.mxu0 0.0
    %78 = vmatprep.subr.mxu0 0.0
    %79 = vmatpush1.msra.mxu0 0.0
    %80 = vmatprep.subr.mxu0 0.0
    %81 = vmatpush1.msra.mxu0 0.0
    %82 = vmatprep.subr.mxu0 0.0
    %83 = vmatpush1.msra.mxu0 0.0
    %84 = vmatprep.subr.mxu0 0.0
    %85 = vmatpush1.msra.mxu0 0.0
    %86 = vmatprep.subr.mxu0 0.0
    %87 = vmatpush1.msra.mxu0 0.0
    %88 = vmatprep.subr.mxu0 0.0
    %89 = vmatpush1.msra.mxu0 0.0
    %90 = vmatprep.subr.mxu0 0.0
    %91 = vmatpush1.msra.mxu0 0.0
    %92 = vmatprep.subr.mxu0 0.0
    %93 = vmatpush1.msra.mxu0 0.0
    %94 = vmatprep.subr.mxu0 0.0
    %95 = vmatpush1.msra.mxu0 0.0
    %96 = vmatprep.subr.mxu0 0.0
    %97 = vmatpush1.msra.mxu0 0.0
    %98 = vmatprep.subr.mxu0 0.0
    %99 = vmatpush1.msra.mxu0 0.0
    %100 = vmatprep.subr.mxu0 0.0
    %101 = vmatpush1.msra.mxu0 0.0
    %102 = vmatprep.subr.mxu0 0.0
    %103 = vmatpush1.msra.mxu0 0.0
    %104 = vmatprep.subr.mxu0 0.0
    %105 = vmatpush1.msra.mxu0 0.0
    %106 = vmatprep.subr.mxu0 0.0
    %107 = vmatpush1.msra.mxu0 0.0
    %108 = vmatprep.subr.mxu0 0.0
    %109 = vmatpush1.msra.mxu0 0.0
    %110 = vmatprep.subr.mxu0 0.0
    %111 = vmatpush1.msra.mxu0 0.0
    %112 = vmatprep.subr.mxu0 0.0
    %113 = vmatpush1.msra.mxu0 0.0
    %114 = vmatprep.subr.mxu0 0.0
    %115 = vmatpush1.msra.mxu0 0.0
    %116 = vmatprep.subr.mxu0 0.0
    %117 = vmatpush1.msra.mxu0 0.0
    %118 = vmatprep.subr.mxu0 0.0
    %119 = vmatpush1.msra.mxu0 0.0
    %120 = vmatprep.subr.mxu0 0.0
    %121 = vmatpush1.msra.mxu0 0.0
    %122 = vmatprep.mubr.f32.mxu0 0.0
    %123 = vmatmul.mubr.f32.gmra.mrb[0].mxu0 %v53
    %v124 = vpop.f32.mrb[0].mxu0
    %v125 = vadd.f32 %v50, %v124
    %v126 = vpop.f32.mrb[0].mxu0
    %127 = vmatprep.mubr.f32.mxu0 0.0
    %128 = vmatmul.mubr.f32.gmra.mrb[0].mxu0 %v56
    %v129 = vpop.f32.mrb[0].mxu0
    %v130 = vadd.f32 %v50, %v129
    %v131 = vpop.f32.mrb[0].mxu0
    %132 = vdwg.mxu0
    %134 = vrot.lane.b32.xlu0 %v125, 96
    %v135 = vpop.permute.xlu0 %134
    %vm136 = vcmask 64512
    %v137 = vsel %vm136, %v125, 0
    %v139 = vsel %vm136, %v135, 0
    %141 = vmatprep.subr.mxu0 0.0
    %142 = vmatpush1.xpose.msra.mxu0 %v139
    %143 = vmatprep.subr.mxu0 0.0
    %144 = vmatpush1.xpose.msra.mxu0 0.0
    %145 = vmatprep.subr.mxu0 0.0
    %146 = vmatpush1.xpose.msra.mxu0 0.0
    %147 = vmatprep.subr.mxu0 0.0
    %148 = vmatpush1.xpose.msra.mxu0 0.0
    %149 = vmatprep.subr.mxu0 0.0
    %150 = vmatpush1.xpose.msra.mxu0 0.0
    %151 = vmatprep.subr.mxu0 0.0
    %152 = vmatpush1.xpose.msra.mxu0 0.0
    %153 = vmatprep.subr.mxu0 0.0
    %154 = vmatpush1.xpose.msra.mxu0 0.0
    %155 = vmatprep.subr.mxu0 0.0
    %156 = vmatpush1.xpose.msra.mxu0 0.0
    %157 = vmatprep.subr.mxu0 0.0
    %158 = vmatpush1.xpose.msra.mxu0 0.0
    %159 = vmatprep.subr.mxu0 0.0
    %160 = vmatpush1.xpose.msra.mxu0 0.0
    %161 = vmatprep.subr.mxu0 0.0
    %162 = vmatpush1.xpose.msra.mxu0 0.0
    %163 = vmatprep.subr.mxu0 0.0
    %164 = vmatpush1.xpose.msra.mxu0 0.0
    %165 = vmatprep.subr.mxu0 0.0
    %166 = vmatpush1.xpose.msra.mxu0 0.0
    %167 = vmatprep.subr.mxu0 0.0
    %168 = vmatpush1.xpose.msra.mxu0 0.0
    %169 = vmatprep.subr.mxu0 0.0
    %170 = vmatpush1.xpose.msra.mxu0 0.0
    %171 = vmatprep.subr.mxu0 0.0
    %172 = vmatpush1.xpose.msra.mxu0 0.0
    %173 = vmatprep.subr.mxu0 0.0
    %174 = vmatpush1.xpose.msra.mxu0 0.0
    %175 = vmatprep.subr.mxu0 0.0
    %176 = vmatpush1.xpose.msra.mxu0 0.0
    %177 = vmatprep.subr.mxu0 0.0
    %178 = vmatpush1.xpose.msra.mxu0 0.0
    %179 = vmatprep.subr.mxu0 0.0
    %180 = vmatpush1.xpose.msra.mxu0 0.0
    %181 = vmatprep.subr.mxu0 0.0
    %182 = vmatpush1.xpose.msra.mxu0 0.0
    %183 = vmatprep.subr.mxu0 0.0
    %184 = vmatpush1.xpose.msra.mxu0 0.0
    %185 = vmatprep.subr.mxu0 0.0
    %186 = vmatpush1.xpose.msra.mxu0 0.0
    %187 = vmatprep.subr.mxu0 0.0
    %188 = vmatpush1.xpose.msra.mxu0 0.0
    %189 = vmatprep.subr.mxu0 0.0
    %190 = vmatpush1.xpose.msra.mxu0 0.0
    %191 = vmatprep.subr.mxu0 0.0
    %192 = vmatpush1.xpose.msra.mxu0 0.0
    %193 = vmatprep.subr.mxu0 0.0
    %194 = vmatpush1.xpose.msra.mxu0 0.0
    %195 = vmatprep.subr.mxu0 0.0
    %196 = vmatpush1.xpose.msra.mxu0 0.0
    %197 = vmatprep.subr.mxu0 0.0
    %198 = vmatpush1.xpose.msra.mxu0 0.0
    %199 = vmatprep.subr.mxu0 0.0
    %200 = vmatpush1.xpose.msra.mxu0 0.0
    %201 = vmatprep.subr.mxu0 0.0
    %202 = vmatpush1.xpose.msra.mxu0 0.0
    %203 = vmatprep.subr.mxu0 0.0
    %204 = vmatpush1.xpose.msra.mxu0 0.0
    %205 = vmatprep.mubr.f32.mxu0 0.0
    %206 = vmatmul.mubr.f32.gmra.mrb[0].mxu0 %v137
    %v207 = vpop.f32.mrb[0].mxu0
    %v208 = vadd.f32 0.0, %v207
    %v209 = vpop.f32.mrb[0].mxu0
    %210 = vdwg.mxu0
    %212 = vrot.lane.b32.xlu0 %v130, 96
    %v213 = vpop.permute.xlu0 %212
    %v214 = vsel %vm136, %v130, 0
    %v216 = vsel %vm136, %v213, 0
    %218 = vmatprep.subr.mxu0 0.0
    %219 = vmatpush1.xpose.msra.mxu0 %v216
    %220 = vmatprep.subr.mxu0 0.0
    %221 = vmatpush1.xpose.msra.mxu0 0.0
    %222 = vmatprep.subr.mxu0 0.0
    %223 = vmatpush1.xpose.msra.mxu0 0.0
    %224 = vmatprep.subr.mxu0 0.0
    %225 = vmatpush1.xpose.msra.mxu0 0.0
    %226 = vmatprep.subr.mxu0 0.0
    %227 = vmatpush1.xpose.msra.mxu0 0.0
    %228 = vmatprep.subr.mxu0 0.0
    %229 = vmatpush1.xpose.msra.mxu0 0.0
    %230 = vmatprep.subr.mxu0 0.0
    %231 = vmatpush1.xpose.msra.mxu0 0.0
    %232 = vmatprep.subr.mxu0 0.0
    %233 = vmatpush1.xpose.msra.mxu0 0.0
    %234 = vmatprep.subr.mxu0 0.0
    %235 = vmatpush1.xpose.msra.mxu0 0.0
    %236 = vmatprep.subr.mxu0 0.0
    %237 = vmatpush1.xpose.msra.mxu0 0.0
    %238 = vmatprep.subr.mxu0 0.0
    %239 = vmatpush1.xpose.msra.mxu0 0.0
    %240 = vmatprep.subr.mxu0 0.0
    %241 = vmatpush1.xpose.msra.mxu0 0.0
    %242 = vmatprep.subr.mxu0 0.0
    %243 = vmatpush1.xpose.msra.mxu0 0.0
    %244 = vmatprep.subr.mxu0 0.0
    %245 = vmatpush1.xpose.msra.mxu0 0.0
    %246 = vmatprep.subr.mxu0 0.0
    %247 = vmatpush1.xpose.msra.mxu0 0.0
    %248 = vmatprep.subr.mxu0 0.0
    %249 = vmatpush1.xpose.msra.mxu0 0.0
    %250 = vmatprep.subr.mxu0 0.0
    %251 = vmatpush1.xpose.msra.mxu0 0.0
    %252 = vmatprep.subr.mxu0 0.0
    %253 = vmatpush1.xpose.msra.mxu0 0.0
    %254 = vmatprep.subr.mxu0 0.0
    %255 = vmatpush1.xpose.msra.mxu0 0.0
    %256 = vmatprep.subr.mxu0 0.0
    %257 = vmatpush1.xpose.msra.mxu0 0.0
    %258 = vmatprep.subr.mxu0 0.0
    %259 = vmatpush1.xpose.msra.mxu0 0.0
    %260 = vmatprep.subr.mxu0 0.0
    %261 = vmatpush1.xpose.msra.mxu0 0.0
    %262 = vmatprep.subr.mxu0 0.0
    %263 = vmatpush1.xpose.msra.mxu0 0.0
    %264 = vmatprep.subr.mxu0 0.0
    %265 = vmatpush1.xpose.msra.mxu0 0.0
    %266 = vmatprep.subr.mxu0 0.0
    %267 = vmatpush1.xpose.msra.mxu0 0.0
    %268 = vmatprep.subr.mxu0 0.0
    %269 = vmatpush1.xpose.msra.mxu0 0.0
    %270 = vmatprep.subr.mxu0 0.0
    %271 = vmatpush1.xpose.msra.mxu0 0.0
    %272 = vmatprep.subr.mxu0 0.0
    %273 = vmatpush1.xpose.msra.mxu0 0.0
    %274 = vmatprep.subr.mxu0 0.0
    %275 = vmatpush1.xpose.msra.mxu0 0.0
    %276 = vmatprep.subr.mxu0 0.0
    %277 = vmatpush1.xpose.msra.mxu0 0.0
    %278 = vmatprep.subr.mxu0 0.0
    %279 = vmatpush1.xpose.msra.mxu0 0.0
    %280 = vmatprep.subr.mxu0 0.0
    %281 = vmatpush1.xpose.msra.mxu0 0.0
    %282 = vmatprep.mubr.f32.mxu0 0.0
    %283 = vmatmul.mubr.f32.gmra.mrb[0].mxu0 %v214
    %v284 = vpop.f32.mrb[0].mxu0
    %v285 = vadd.f32 0.0, %v284
    %v286 = vpop.f32.mrb[0].mxu0
    %287 = vdwg.mxu0
    %v288 = vsel %vm136, %v208, -inf
    %289 = vmax.xlane.f32.xlu0 %v288
    %v290 = vpop.xlane.xlu0 %289
    %v291 = vsel %vm136, %v285, -inf
    %292 = vmax.xlane.f32.xlu0 %v291
    %v293 = vpop.xlane.xlu0 %292
    %v294 = vsub.f32 %v208, %v290
    %v295 = vsub.f32 %v285, %v293
    %v296 = vmul.f32 %v294, 1.442695
    %v297 = vpow.pop %v296
    %v298 = vmul.f32 %v295, 1.442695
    %v299 = vpow.pop %v298
    %v300 = vsel %vm136, %v297, 0.0
    %301 = vadd.xlane.f32.xlu0 %v300
    %v302 = vpop.xlane.xlu0 %301
    %v303 = vsel %vm136, %v299, 0.0
    %304 = vadd.xlane.f32.xlu0 %v303
    %v305 = vpop.xlane.xlu0 %304
    %v306 = vrcp.pop %v302
    %v307 = vrcp.pop %v305
    %v308 = vmul.f32 %v297, %v306
    %v309 = vmul.f32 %v299, %v307
    %310 = vrot.lane.b32.xlu0 %v125, 64
    %v311 = vpop.permute.xlu0 %310
    %v314 = vsel %vm136, %v308, 0
    %316 = vmatprep.subr.mxu0 0.0
    %317 = vmatpush1.msra.mxu0 %v311
    %318 = vmatprep.subr.mxu0 0.0
    %319 = vmatpush1.msra.mxu0 0.0
    %320 = vmatprep.subr.mxu0 0.0
    %321 = vmatpush1.msra.mxu0 0.0
    %322 = vmatprep.subr.mxu0 0.0
    %323 = vmatpush1.msra.mxu0 0.0
    %324 = vmatprep.subr.mxu0 0.0
    %325 = vmatpush1.msra.mxu0 0.0
    %326 = vmatprep.subr.mxu0 0.0
    %327 = vmatpush1.msra.mxu0 0.0
    %328 = vmatprep.subr.mxu0 0.0
    %329 = vmatpush1.msra.mxu0 0.0
    %330 = vmatprep.subr.mxu0 0.0
    %331 = vmatpush1.msra.mxu0 0.0
    %332 = vmatprep.subr.mxu0 0.0
    %333 = vmatpush1.msra.mxu0 0.0
    %334 = vmatprep.subr.mxu0 0.0
    %335 = vmatpush1.msra.mxu0 0.0
    %336 = vmatprep.subr.mxu0 0.0
    %337 = vmatpush1.msra.mxu0 0.0
    %338 = vmatprep.subr.mxu0 0.0
    %339 = vmatpush1.msra.mxu0 0.0
    %340 = vmatprep.subr.mxu0 0.0
    %341 = vmatpush1.msra.mxu0 0.0
    %342 = vmatprep.subr.mxu0 0.0
    %343 = vmatpush1.msra.mxu0 0.0
    %344 = vmatprep.subr.mxu0 0.0
    %345 = vmatpush1.msra.mxu0 0.0
    %346 = vmatprep.subr.mxu0 0.0
    %347 = vmatpush1.msra.mxu0 0.0
    %348 = vmatprep.subr.mxu0 0.0
    %349 = vmatpush1.msra.mxu0 0.0
    %350 = vmatprep.subr.mxu0 0.0
    %351 = vmatpush1.msra.mxu0 0.0
    %352 = vmatprep.subr.mxu0 0.0
    %353 = vmatpush1.msra.mxu0 0.0
    %354 = vmatprep.subr.mxu0 0.0
    %355 = vmatpush1.msra.mxu0 0.0
    %356 = vmatprep.subr.mxu0 0.0
    %357 = vmatpush1.msra.mxu0 0.0
    %358 = vmatprep.subr.mxu0 0.0
    %359 = vmatpush1.msra.mxu0 0.0
    %360 = vmatprep.subr.mxu0 0.0
    %361 = vmatpush1.msra.mxu0 0.0
    %362 = vmatprep.subr.mxu0 0.0
    %363 = vmatpush1.msra.mxu0 0.0
    %364 = vmatprep.subr.mxu0 0.0
    %365 = vmatpush1.msra.mxu0 0.0
    %366 = vmatprep.subr.mxu0 0.0
    %367 = vmatpush1.msra.mxu0 0.0
    %368 = vmatprep.subr.mxu0 0.0
    %369 = vmatpush1.msra.mxu0 0.0
    %370 = vmatprep.subr.mxu0 0.0
    %371 = vmatpush1.msra.mxu0 0.0
    %372 = vmatprep.subr.mxu0 0.0
    %373 = vmatpush1.msra.mxu0 0.0
    %374 = vmatprep.subr.mxu0 0.0
    %375 = vmatpush1.msra.mxu0 0.0
    %376 = vmatprep.subr.mxu0 0.0
    %377 = vmatpush1.msra.mxu0 0.0
    %378 = vmatprep.subr.mxu0 0.0
    %379 = vmatpush1.msra.mxu0 0.0
    %380 = vmatprep.mubr.f32.mxu0 0.0
    %381 = vmatmul.mubr.f32.gmra.mrb[0].mxu0 %v314
    %v382 = vpop.f32.mrb[0].mxu0
    %v383 = vadd.f32 0.0, %v382
    %v384 = vpop.f32.mrb[0].mxu0
    %385 = vdwg.mxu0
    %386 = vrot.lane.b32.xlu0 %v130, 64
    %v387 = vpop.permute.xlu0 %386
    %v390 = vsel %vm136, %v309, 0
    %392 = vmatprep.subr.mxu0 0.0
    %393 = vmatpush1.msra.mxu0 %v387
    %394 = vmatprep.subr.mxu0 0.0
    %395 = vmatpush1.msra.mxu0 0.0
    %396 = vmatprep.subr.mxu0 0.0
    %397 = vmatpush1.msra.mxu0 0.0
    %398 = vmatprep.subr.mxu0 0.0
    %399 = vmatpush1.msra.mxu0 0.0
    %400 = vmatprep.subr.mxu0 0.0
    %401 = vmatpush1.msra.mxu0 0.0
    %402 = vmatprep.subr.mxu0 0.0
    %403 = vmatpush1.msra.mxu0 0.0
    %404 = vmatprep.subr.mxu0 0.0
    %405 = vmatpush1.msra.mxu0 0.0
    %406 = vmatprep.subr.mxu0 0.0
    %407 = vmatpush1.msra.mxu0 0.0
    %408 = vmatprep.subr.mxu0 0.0
    %409 = vmatpush1.msra.mxu0 0.0
    %410 = vmatprep.subr.mxu0 0.0
    %411 = vmatpush1.msra.mxu0 0.0
    %412 = vmatprep.subr.mxu0 0.0
    %413 = vmatpush1.msra.mxu0 0.0
    %414 = vmatprep.subr.mxu0 0.0
    %415 = vmatpush1.msra.mxu0 0.0
    %416 = vmatprep.subr.mxu0 0.0
    %417 = vmatpush1.msra.mxu0 0.0
    %418 = vmatprep.subr.mxu0 0.0
    %419 = vmatpush1.msra.mxu0 0.0
    %420 = vmatprep.subr.mxu0 0.0
    %421 = vmatpush1.msra.mxu0 0.0
    %422 = vmatprep.subr.mxu0 0.0
    %423 = vmatpush1.msra.mxu0 0.0
    %424 = vmatprep.subr.mxu0 0.0
    %425 = vmatpush1.msra.mxu0 0.0
    %426 = vmatprep.subr.mxu0 0.0
    %427 = vmatpush1.msra.mxu0 0.0
    %428 = vmatprep.subr.mxu0 0.0
    %429 = vmatpush1.msra.mxu0 0.0
    %430 = vmatprep.subr.mxu0 0.0
    %431 = vmatpush1.msra.mxu0 0.0
    %432 = vmatprep.subr.mxu0 0.0
    %433 = vmatpush1.msra.mxu0 0.0
    %434 = vmatprep.subr.mxu0 0.0
    %435 = vmatpush1.msra.mxu0 0.0
    %436 = vmatprep.subr.mxu0 0.0
    %437 = vmatpush1.msra.mxu0 0.0
    %438 = vmatprep.subr.mxu0 0.0
    %439 = vmatpush1.msra.mxu0 0.0
    %440 = vmatprep.subr.mxu0 0.0
    %441 = vmatpush1.msra.mxu0 0.0
    %442 = vmatprep.subr.mxu0 0.0
    %443 = vmatpush1.msra.mxu0 0.0
    %444 = vmatprep.subr.mxu0 0.0
    %445 = vmatpush1.msra.mxu0 0.0
    %446 = vmatprep.subr.mxu0 0.0
    %447 = vmatpush1.msra.mxu0 0.0
    %448 = vmatprep.subr.mxu0 0.0
    %449 = vmatpush1.msra.mxu0 0.0
    %450 = vmatprep.subr.mxu0 0.0
    %451 = vmatpush1.msra.mxu0 0.0
    %452 = vmatprep.subr.mxu0 0.0
    %453 = vmatpush1.msra.mxu0 0.0
    %454 = vmatprep.subr.mxu0 0.0
    %455 = vmatpush1.msra.mxu0 0.0
    %456 = vmatprep.mubr.f32.mxu0 0.0
    %457 = vmatmul.mubr.f32.gmra.mrb[0].mxu0 %v390
    %v458 = vpop.f32.mrb[0].mxu0
    %v459 = vadd.f32 0.0, %v458
    %v460 = vpop.f32.mrb[0].mxu0
    %461 = vdwg.mxu0
    %462 = vrot.lane.b32.xlu0 %v125, 120
    %v463 = vpop.permute.xlu0 %462
    %464 = vrot.lane.b32.xlu0 %v125, 88
    %v465 = vpop.permute.xlu0 %464
    %v466 = vsel %vm136, %v463, 0
    %v468 = vsel %vm136, %v465, 0
    %470 = vmatprep.subr.mxu0 0.0
    %471 = vmatpush1.xpose.msra.mxu0 %v468
    %472 = vmatprep.subr.mxu0 0.0
    %473 = vmatpush1.xpose.msra.mxu0 0.0
    %474 = vmatprep.subr.mxu0 0.0
    %475 = vmatpush1.xpose.msra.mxu0 0.0
    %476 = vmatprep.subr.mxu0 0.0
    %477 = vmatpush1.xpose.msra.mxu0 0.0
    %478 = vmatprep.subr.mxu0 0.0
    %479 = vmatpush1.xpose.msra.mxu0 0.0
    %480 = vmatprep.subr.mxu0 0.0
    %481 = vmatpush1.xpose.msra.mxu0 0.0
    %482 = vmatprep.subr.mxu0 0.0
    %483 = vmatpush1.xpose.msra.mxu0 0.0
    %484 = vmatprep.subr.mxu0 0.0
    %485 = vmatpush1.xpose.msra.mxu0 0.0
    %486 = vmatprep.subr.mxu0 0.0
    %487 = vmatpush1.xpose.msra.mxu0 0.0
    %488 = vmatprep.subr.mxu0 0.0
    %489 = vmatpush1.xpose.msra.mxu0 0.0
    %490 = vmatprep.subr.mxu0 0.0
    %491 = vmatpush1.xpose.msra.mxu0 0.0
    %492 = vmatprep.subr.mxu0 0.0
    %493 = vmatpush1.xpose.msra.mxu0 0.0
    %494 = vmatprep.subr.mxu0 0.0
    %495 = vmatpush1.xpose.msra.mxu0 0.0
    %496 = vmatprep.subr.mxu0 0.0
    %497 = vmatpush1.xpose.msra.mxu0 0.0
    %498 = vmatprep.subr.mxu0 0.0
    %499 = vmatpush1.xpose.msra.mxu0 0.0
    %500 = vmatprep.subr.mxu0 0.0
    %501 = vmatpush1.xpose.msra.mxu0 0.0
    %502 = vmatprep.subr.mxu0 0.0
    %503 = vmatpush1.xpose.msra.mxu0 0.0
    %504 = vmatprep.subr.mxu0 0.0
    %505 = vmatpush1.xpose.msra.mxu0 0.0
    %506 = vmatprep.subr.mxu0 0.0
    %507 = vmatpush1.xpose.msra.mxu0 0.0
    %508 = vmatprep.subr.mxu0 0.0
    %509 = vmatpush1.xpose.msra.mxu0 0.0
    %510 = vmatprep.subr.mxu0 0.0
    %511 = vmatpush1.xpose.msra.mxu0 0.0
    %512 = vmatprep.subr.mxu0 0.0
    %513 = vmatpush1.xpose.msra.mxu0 0.0
    %514 = vmatprep.subr.mxu0 0.0
    %515 = vmatpush1.xpose.msra.mxu0 0.0
    %516 = vmatprep.subr.mxu0 0.0
    %517 = vmatpush1.xpose.msra.mxu0 0.0
    %518 = vmatprep.subr.mxu0 0.0
    %519 = vmatpush1.xpose.msra.mxu0 0.0
    %520 = vmatprep.subr.mxu0 0.0
    %521 = vmatpush1.xpose.msra.mxu0 0.0
    %522 = vmatprep.subr.mxu0 0.0
    %523 = vmatpush1.xpose.msra.mxu0 0.0
    %524 = vmatprep.subr.mxu0 0.0
    %525 = vmatpush1.xpose.msra.mxu0 0.0
    %526 = vmatprep.subr.mxu0 0.0
    %527 = vmatpush1.xpose.msra.mxu0 0.0
    %528 = vmatprep.subr.mxu0 0.0
    %529 = vmatpush1.xpose.msra.mxu0 0.0
    %530 = vmatprep.subr.mxu0 0.0
    %531 = vmatpush1.xpose.msra.mxu0 0.0
    %532 = vmatprep.subr.mxu0 0.0
    %533 = vmatpush1.xpose.msra.mxu0 0.0
    %534 = vmatprep.mubr.f32.mxu0 0.0
    %535 = vmatmul.mubr.f32.gmra.mrb[0].mxu0 %v466
    %v536 = vpop.f32.mrb[0].mxu0
    %v537 = vadd.f32 0.0, %v536
    %v538 = vpop.f32.mrb[0].mxu0
    %539 = vdwg.mxu0
    %540 = vrot.lane.b32.xlu0 %v130, 120
    %v541 = vpop.permute.xlu0 %540
    %542 = vrot.lane.b32.xlu0 %v130, 88
    %v543 = vpop.permute.xlu0 %542
    %v544 = vsel %vm136, %v541, 0
    %v546 = vsel %vm136, %v543, 0
    %548 = vmatprep.subr.mxu0 0.0
    %549 = vmatpush1.xpose.msra.mxu0 %v546
    %550 = vmatprep.subr.mxu0 0.0
    %551 = vmatpush1.xpose.msra.mxu0 0.0
    %552 = vmatprep.subr.mxu0 0.0
    %553 = vmatpush1.xpose.msra.mxu0 0.0
    %554 = vmatprep.subr.mxu0 0.0
    %555 = vmatpush1.xpose.msra.mxu0 0.0
    %556 = vmatprep.subr.mxu0 0.0
    %557 = vmatpush1.xpose.msra.mxu0 0.0
    %558 = vmatprep.subr.mxu0 0.0
    %559 = vmatpush1.xpose.msra.mxu0 0.0
    %560 = vmatprep.subr.mxu0 0.0
    %561 = vmatpush1.xpose.msra.mxu0 0.0
    %562 = vmatprep.subr.mxu0 0.0
    %563 = vmatpush1.xpose.msra.mxu0 0.0
    %564 = vmatprep.subr.mxu0 0.0
    %565 = vmatpush1.xpose.msra.mxu0 0.0
    %566 = vmatprep.subr.mxu0 0.0
    %567 = vmatpush1.xpose.msra.mxu0 0.0
    %568 = vmatprep.subr.mxu0 0.0
    %569 = vmatpush1.xpose.msra.mxu0 0.0
    %570 = vmatprep.subr.mxu0 0.0
    %571 = vmatpush1.xpose.msra.mxu0 0.0
    %572 = vmatprep.subr.mxu0 0.0
    %573 = vmatpush1.xpose.msra.mxu0 0.0
    %574 = vmatprep.subr.mxu0 0.0
    %575 = vmatpush1.xpose.msra.mxu0 0.0
    %576 = vmatprep.subr.mxu0 0.0
    %577 = vmatpush1.xpose.msra.mxu0 0.0
    %578 = vmatprep.subr.mxu0 0.0
    %579 = vmatpush1.xpose.msra.mxu0 0.0
    %580 = vmatprep.subr.mxu0 0.0
    %581 = vmatpush1.xpose.msra.mxu0 0.0
    %582 = vmatprep.subr.mxu0 0.0
    %583 = vmatpush1.xpose.msra.mxu0 0.0
    %584 = vmatprep.subr.mxu0 0.0
    %585 = vmatpush1.xpose.msra.mxu0 0.0
    %586 = vmatprep.subr.mxu0 0.0
    %587 = vmatpush1.xpose.msra.mxu0 0.0
    %588 = vmatprep.subr.mxu0 0.0
    %589 = vmatpush1.xpose.msra.mxu0 0.0
    %590 = vmatprep.subr.mxu0 0.0
    %591 = vmatpush1.xpose.msra.mxu0 0.0
    %592 = vmatprep.subr.mxu0 0.0
    %593 = vmatpush1.xpose.msra.mxu0 0.0
    %594 = vmatprep.subr.mxu0 0.0
    %595 = vmatpush1.xpose.msra.mxu0 0.0
    %596 = vmatprep.subr.mxu0 0.0
    %597 = vmatpush1.xpose.msra.mxu0 0.0
    %598 = vmatprep.subr.mxu0 0.0
    %599 = vmatpush1.xpose.msra.mxu0 0.0
    %600 = vmatprep.subr.mxu0 0.0
    %601 = vmatpush1.xpose.msra.mxu0 0.0
    %602 = vmatprep.subr.mxu0 0.0
    %603 = vmatpush1.xpose.msra.mxu0 0.0
    %604 = vmatprep.subr.mxu0 0.0
    %605 = vmatpush1.xpose.msra.mxu0 0.0
    %606 = vmatprep.subr.mxu0 0.0
    %607 = vmatpush1.xpose.msra.mxu0 0.0
    %608 = vmatprep.subr.mxu0 0.0
    %609 = vmatpush1.xpose.msra.mxu0 0.0
    %610 = vmatprep.subr.mxu0 0.0
    %611 = vmatpush1.xpose.msra.mxu0 0.0
    %612 = vmatprep.mubr.f32.mxu0 0.0
    %613 = vmatmul.mubr.f32.gmra.mrb[0].mxu0 %v544
    %v614 = vpop.f32.mrb[0].mxu0
    %v615 = vadd.f32 0.0, %v614
    %v616 = vpop.f32.mrb[0].mxu0
    %617 = vdwg.mxu0
    %v618 = vsel %vm136, %v537, -inf
    %619 = vmax.xlane.f32.xlu0 %v618
    %v620 = vpop.xlane.xlu0 %619
    %v621 = vsel %vm136, %v615, -inf
    %622 = vmax.xlane.f32.xlu0 %v621
    %v623 = vpop.xlane.xlu0 %622
    %v624 = vsub.f32 %v537, %v620
    %v625 = vsub.f32 %v615, %v623
    %v626 = vmul.f32 %v624, 1.442695
    %v627 = vpow.pop %v626
    %v628 = vmul.f32 %v625, 1.442695
    %v629 = vpow.pop %v628
    %v630 = vsel %vm136, %v627, 0.0
    %631 = vadd.xlane.f32.xlu0 %v630
    %v632 = vpop.xlane.xlu0 %631
    %v633 = vsel %vm136, %v629, 0.0
    %634 = vadd.xlane.f32.xlu0 %v633
    %v635 = vpop.xlane.xlu0 %634
    %v636 = vrcp.pop %v632
    %v637 = vrcp.pop %v635
    %v638 = vmul.f32 %v627, %v636
    %v639 = vmul.f32 %v629, %v637
    %640 = vrot.lane.b32.xlu0 %v125, 56
    %v641 = vpop.permute.xlu0 %640
    %v644 = vsel %vm136, %v638, 0
    %646 = vmatprep.subr.mxu0 0.0
    %647 = vmatpush1.msra.mxu0 %v641
    %648 = vmatprep.subr.mxu0 0.0
    %649 = vmatpush1.msra.mxu0 0.0
    %650 = vmatprep.subr.mxu0 0.0
    %651 = vmatpush1.msra.mxu0 0.0
    %652 = vmatprep.subr.mxu0 0.0
    %653 = vmatpush1.msra.mxu0 0.0
    %654 = vmatprep.subr.mxu0 0.0
    %655 = vmatpush1.msra.mxu0 0.0
    %656 = vmatprep.subr.mxu0 0.0
    %657 = vmatpush1.msra.mxu0 0.0
    %658 = vmatprep.subr.mxu0 0.0
    %659 = vmatpush1.msra.mxu0 0.0
    %660 = vmatprep.subr.mxu0 0.0
    %661 = vmatpush1.msra.mxu0 0.0
    %662 = vmatprep.subr.mxu0 0.0
    %663 = vmatpush1.msra.mxu0 0.0
    %664 = vmatprep.subr.mxu0 0.0
    %665 = vmatpush1.msra.mxu0 0.0
    %666 = vmatprep.subr.mxu0 0.0
    %667 = vmatpush1.msra.mxu0 0.0
    %668 = vmatprep.subr.mxu0 0.0
    %669 = vmatpush1.msra.mxu0 0.0
    %670 = vmatprep.subr.mxu0 0.0
    %671 = vmatpush1.msra.mxu0 0.0
    %672 = vmatprep.subr.mxu0 0.0
    %673 = vmatpush1.msra.mxu0 0.0
    %674 = vmatprep.subr.mxu0 0.0
    %675 = vmatpush1.msra.mxu0 0.0
    %676 = vmatprep.subr.mxu0 0.0
    %677 = vmatpush1.msra.mxu0 0.0
    %678 = vmatprep.subr.mxu0 0.0
    %679 = vmatpush1.msra.mxu0 0.0
    %680 = vmatprep.subr.mxu0 0.0
    %681 = vmatpush1.msra.mxu0 0.0
    %682 = vmatprep.subr.mxu0 0.0
    %683 = vmatpush1.msra.mxu0 0.0
    %684 = vmatprep.subr.mxu0 0.0
    %685 = vmatpush1.msra.mxu0 0.0
    %686 = vmatprep.subr.mxu0 0.0
    %687 = vmatpush1.msra.mxu0 0.0
    %688 = vmatprep.subr.mxu0 0.0
    %689 = vmatpush1.msra.mxu0 0.0
    %690 = vmatprep.subr.mxu0 0.0
    %691 = vmatpush1.msra.mxu0 0.0
    %692 = vmatprep.subr.mxu0 0.0
    %693 = vmatpush1.msra.mxu0 0.0
    %694 = vmatprep.subr.mxu0 0.0
    %695 = vmatpush1.msra.mxu0 0.0
    %696 = vmatprep.subr.mxu0 0.0
    %697 = vmatpush1.msra.mxu0 0.0
    %698 = vmatprep.subr.mxu0 0.0
    %699 = vmatpush1.msra.mxu0 0.0
    %700 = vmatprep.subr.mxu0 0.0
    %701 = vmatpush1.msra.mxu0 0.0
    %702 = vmatprep.subr.mxu0 0.0
    %703 = vmatpush1.msra.mxu0 0.0
    %704 = vmatprep.subr.mxu0 0.0
    %705 = vmatpush1.msra.mxu0 0.0
    %706 = vmatprep.subr.mxu0 0.0
    %707 = vmatpush1.msra.mxu0 0.0
    %708 = vmatprep.subr.mxu0 0.0
    %709 = vmatpush1.msra.mxu0 0.0
    %710 = vmatprep.mubr.f32.mxu0 0.0
    %711 = vmatmul.mubr.f32.gmra.mrb[0].mxu0 %v644
    %v712 = vpop.f32.mrb[0].mxu0
    %v713 = vadd.f32 0.0, %v712
    %v714 = vpop.f32.mrb[0].mxu0
    %715 = vdwg.mxu0
    %716 = vrot.lane.b32.xlu0 %v130, 56
    %v717 = vpop.permute.xlu0 %716
    %v720 = vsel %vm136, %v639, 0
    %722 = vmatprep.subr.mxu0 0.0
    %723 = vmatpush1.msra.mxu0 %v717
    %724 = vmatprep.subr.mxu0 0.0
    %725 = vmatpush1.msra.mxu0 0.0
    %726 = vmatprep.subr.mxu0 0.0
    %727 = vmatpush1.msra.mxu0 0.0
    %728 = vmatprep.subr.mxu0 0.0
    %729 = vmatpush1.msra.mxu0 0.0
    %730 = vmatprep.subr.mxu0 0.0
    %731 = vmatpush1.msra.mxu0 0.0
    %732 = vmatprep.subr.mxu0 0.0
    %733 = vmatpush1.msra.mxu0 0.0
    %734 = vmatprep.subr.mxu0 0.0
    %735 = vmatpush1.msra.mxu0 0.0
    %736 = vmatprep.subr.mxu0 0.0
    %737 = vmatpush1.msra.mxu0 0.0
    %738 = vmatprep.subr.mxu0 0.0
    %739 = vmatpush1.msra.mxu0 0.0
    %740 = vmatprep.subr.mxu0 0.0
    %741 = vmatpush1.msra.mxu0 0.0
    %742 = vmatprep.subr.mxu0 0.0
    %743 = vmatpush1.msra.mxu0 0.0
    %744 = vmatprep.subr.mxu0 0.0
    %745 = vmatpush1.msra.mxu0 0.0
    %746 = vmatprep.subr.mxu0 0.0
    %747 = vmatpush1.msra.mxu0 0.0
    %748 = vmatprep.subr.mxu0 0.0
    %749 = vmatpush1.msra.mxu0 0.0
    %750 = vmatprep.subr.mxu0 0.0
    %751 = vmatpush1.msra.mxu0 0.0
    %752 = vmatprep.subr.mxu0 0.0
    %753 = vmatpush1.msra.mxu0 0.0
    %754 = vmatprep.subr.mxu0 0.0
    %755 = vmatpush1.msra.mxu0 0.0
    %756 = vmatprep.subr.mxu0 0.0
    %757 = vmatpush1.msra.mxu0 0.0
    %758 = vmatprep.subr.mxu0 0.0
    %759 = vmatpush1.msra.mxu0 0.0
    %760 = vmatprep.subr.mxu0 0.0
    %761 = vmatpush1.msra.mxu0 0.0
    %762 = vmatprep.subr.mxu0 0.0
    %763 = vmatpush1.msra.mxu0 0.0
    %764 = vmatprep.subr.mxu0 0.0
    %765 = vmatpush1.msra.mxu0 0.0
    %766 = vmatprep.subr.mxu0 0.0
    %767 = vmatpush1.msra.mxu0 0.0
    %768 = vmatprep.subr.mxu0 0.0
    %769 = vmatpush1.msra.mxu0 0.0
    %770 = vmatprep.subr.mxu0 0.0
    %771 = vmatpush1.msra.mxu0 0.0
    %772 = vmatprep.subr.mxu0 0.0
    %773 = vmatpush1.msra.mxu0 0.0
    %774 = vmatprep.subr.mxu0 0.0
    %775 = vmatpush1.msra.mxu0 0.0
    %776 = vmatprep.subr.mxu0 0.0
    %777 = vmatpush1.msra.mxu0 0.0
    %778 = vmatprep.subr.mxu0 0.0
    %779 = vmatpush1.msra.mxu0 0.0
    %780 = vmatprep.subr.mxu0 0.0
    %781 = vmatpush1.msra.mxu0 0.0
    %782 = vmatprep.subr.mxu0 0.0
    %783 = vmatpush1.msra.mxu0 0.0
    %784 = vmatprep.subr.mxu0 0.0
    %785 = vmatpush1.msra.mxu0 0.0
    %786 = vmatprep.mubr.f32.mxu0 0.0
    %787 = vmatmul.mubr.f32.gmra.mrb[0].mxu0 %v720
    %v788 = vpop.f32.mrb[0].mxu0
    %v789 = vadd.f32 0.0, %v788
    %v790 = vpop.f32.mrb[0].mxu0
    %791 = vdwg.mxu0
    %792 = vrot.lane.b32.xlu0 %v125, 112
    %v793 = vpop.permute.xlu0 %792
    %794 = vrot.lane.b32.xlu0 %v125, 80
    %v795 = vpop.permute.xlu0 %794
    %v796 = vsel %vm136, %v793, 0
    %v798 = vsel %vm136, %v795, 0
    %800 = vmatprep.subr.mxu0 0.0
    %801 = vmatpush1.xpose.msra.mxu0 %v798
    %802 = vmatprep.subr.mxu0 0.0
    %803 = vmatpush1.xpose.msra.mxu0 0.0
    %804 = vmatprep.subr.mxu0 0.0
    %805 = vmatpush1.xpose.msra.mxu0 0.0
    %806 = vmatprep.subr.mxu0 0.0
    %807 = vmatpush1.xpose.msra.mxu0 0.0
    %808 = vmatprep.subr.mxu0 0.0
    %809 = vmatpush1.xpose.msra.mxu0 0.0
    %810 = vmatprep.subr.mxu0 0.0
    %811 = vmatpush1.xpose.msra.mxu0 0.0
    %812 = vmatprep.subr.mxu0 0.0
    %813 = vmatpush1.xpose.msra.mxu0 0.0
    %814 = vmatprep.subr.mxu0 0.0
    %815 = vmatpush1.xpose.msra.mxu0 0.0
    %816 = vmatprep.subr.mxu0 0.0
    %817 = vmatpush1.xpose.msra.mxu0 0.0
    %818 = vmatprep.subr.mxu0 0.0
    %819 = vmatpush1.xpose.msra.mxu0 0.0
    %820 = vmatprep.subr.mxu0 0.0
    %821 = vmatpush1.xpose.msra.mxu0 0.0
    %822 = vmatprep.subr.mxu0 0.0
    %823 = vmatpush1.xpose.msra.mxu0 0.0
    %824 = vmatprep.subr.mxu0 0.0
    %825 = vmatpush1.xpose.msra.mxu0 0.0
    %826 = vmatprep.subr.mxu0 0.0
    %827 = vmatpush1.xpose.msra.mxu0 0.0
    %828 = vmatprep.subr.mxu0 0.0
    %829 = vmatpush1.xpose.msra.mxu0 0.0
    %830 = vmatprep.subr.mxu0 0.0
    %831 = vmatpush1.xpose.msra.mxu0 0.0
    %832 = vmatprep.subr.mxu0 0.0
    %833 = vmatpush1.xpose.msra.mxu0 0.0
    %834 = vmatprep.subr.mxu0 0.0
    %835 = vmatpush1.xpose.msra.mxu0 0.0
    %836 = vmatprep.subr.mxu0 0.0
    %837 = vmatpush1.xpose.msra.mxu0 0.0
    %838 = vmatprep.subr.mxu0 0.0
    %839 = vmatpush1.xpose.msra.mxu0 0.0
    %840 = vmatprep.subr.mxu0 0.0
    %841 = vmatpush1.xpose.msra.mxu0 0.0
    %842 = vmatprep.subr.mxu0 0.0
    %843 = vmatpush1.xpose.msra.mxu0 0.0
    %844 = vmatprep.subr.mxu0 0.0
    %845 = vmatpush1.xpose.msra.mxu0 0.0
    %846 = vmatprep.subr.mxu0 0.0
    %847 = vmatpush1.xpose.msra.mxu0 0.0
    %848 = vmatprep.subr.mxu0 0.0
    %849 = vmatpush1.xpose.msra.mxu0 0.0
    %850 = vmatprep.subr.mxu0 0.0
    %851 = vmatpush1.xpose.msra.mxu0 0.0
    %852 = vmatprep.subr.mxu0 0.0
    %853 = vmatpush1.xpose.msra.mxu0 0.0
    %854 = vmatprep.subr.mxu0 0.0
    %855 = vmatpush1.xpose.msra.mxu0 0.0
    %856 = vmatprep.subr.mxu0 0.0
    %857 = vmatpush1.xpose.msra.mxu0 0.0
    %858 = vmatprep.subr.mxu0 0.0
    %859 = vmatpush1.xpose.msra.mxu0 0.0
    %860 = vmatprep.subr.mxu0 0.0
    %861 = vmatpush1.xpose.msra.mxu0 0.0
    %862 = vmatprep.subr.mxu0 0.0
    %863 = vmatpush1.xpose.msra.mxu0 0.0
    %864 = vmatprep.mubr.f32.mxu0 0.0
    %865 = vmatmul.mubr.f32.gmra.mrb[0].mxu0 %v796
    %v866 = vpop.f32.mrb[0].mxu0
    %v867 = vadd.f32 0.0, %v866
    %v868 = vpop.f32.mrb[0].mxu0
    %869 = vdwg.mxu0
    %870 = vrot.lane.b32.xlu0 %v130, 112
    %v871 = vpop.permute.xlu0 %870
    %872 = vrot.lane.b32.xlu0 %v130, 80
    %v873 = vpop.permute.xlu0 %872
    %v874 = vsel %vm136, %v871, 0
    %v876 = vsel %vm136, %v873, 0
    %878 = vmatprep.subr.mxu0 0.0
    %879 = vmatpush1.xpose.msra.mxu0 %v876
    %880 = vmatprep.subr.mxu0 0.0
    %881 = vmatpush1.xpose.msra.mxu0 0.0
    %882 = vmatprep.subr.mxu0 0.0
    %883 = vmatpush1.xpose.msra.mxu0 0.0
    %884 = vmatprep.subr.mxu0 0.0
    %885 = vmatpush1.xpose.msra.mxu0 0.0
    %886 = vmatprep.subr.mxu0 0.0
    %887 = vmatpush1.xpose.msra.mxu0 0.0
    %888 = vmatprep.subr.mxu0 0.0
    %889 = vmatpush1.xpose.msra.mxu0 0.0
    %890 = vmatprep.subr.mxu0 0.0
    %891 = vmatpush1.xpose.msra.mxu0 0.0
    %892 = vmatprep.subr.mxu0 0.0
    %893 = vmatpush1.xpose.msra.mxu0 0.0
    %894 = vmatprep.subr.mxu0 0.0
    %895 = vmatpush1.xpose.msra.mxu0 0.0
    %896 = vmatprep.subr.mxu0 0.0
    %897 = vmatpush1.xpose.msra.mxu0 0.0
    %898 = vmatprep.subr.mxu0 0.0
    %899 = vmatpush1.xpose.msra.mxu0 0.0
    %900 = vmatprep.subr.mxu0 0.0
    %901 = vmatpush1.xpose.msra.mxu0 0.0
    %902 = vmatprep.subr.mxu0 0.0
    %903 = vmatpush1.xpose.msra.mxu0 0.0
    %904 = vmatprep.subr.mxu0 0.0
    %905 = vmatpush1.xpose.msra.mxu0 0.0
    %906 = vmatprep.subr.mxu0 0.0
    %907 = vmatpush1.xpose.msra.mxu0 0.0
    %908 = vmatprep.subr.mxu0 0.0
    %909 = vmatpush1.xpose.msra.mxu0 0.0
    %910 = vmatprep.subr.mxu0 0.0
    %911 = vmatpush1.xpose.msra.mxu0 0.0
    %912 = vmatprep.subr.mxu0 0.0
    %913 = vmatpush1.xpose.msra.mxu0 0.0
    %914 = vmatprep.subr.mxu0 0.0
    %915 = vmatpush1.xpose.msra.mxu0 0.0
    %916 = vmatprep.subr.mxu0 0.0
    %917 = vmatpush1.xpose.msra.mxu0 0.0
    %918 = vmatprep.subr.mxu0 0.0
    %919 = vmatpush1.xpose.msra.mxu0 0.0
    %920 = vmatprep.subr.mxu0 0.0
    %921 = vmatpush1.xpose.msra.mxu0 0.0
    %922 = vmatprep.subr.mxu0 0.0
    %923 = vmatpush1.xpose.msra.mxu0 0.0
    %924 = vmatprep.subr.mxu0 0.0
    %925 = vmatpush1.xpose.msra.mxu0 0.0
    %926 = vmatprep.subr.mxu0 0.0
    %927 = vmatpush1.xpose.msra.mxu0 0.0
    %928 = vmatprep.subr.mxu0 0.0
    %929 = vmatpush1.xpose.msra.mxu0 0.0
    %930 = vmatprep.subr.mxu0 0.0
    %931 = vmatpush1.xpose.msra.mxu0 0.0
    %932 = vmatprep.subr.mxu0 0.0
    %933 = vmatpush1.xpose.msra.mxu0 0.0
    %934 = vmatprep.subr.mxu0 0.0
    %935 = vmatpush1.xpose.msra.mxu0 0.0
    %936 = vmatprep.subr.mxu0 0.0
    %937 = vmatpush1.xpose.msra.mxu0 0.0
    %938 = vmatprep.subr.mxu0 0.0
    %939 = vmatpush1.xpose.msra.mxu0 0.0
    %940 = vmatprep.subr.mxu0 0.0
    %941 = vmatpush1.xpose.msra.mxu0 0.0
    %942 = vmatprep.mubr.f32.mxu0 0.0
    %943 = vmatmul.mubr.f32.gmra.mrb[0].mxu0 %v874
    %v944 = vpop.f32.mrb[0].mxu0
    %v945 = vadd.f32 0.0, %v944
    %v946 = vpop.f32.mrb[0].mxu0
    %947 = vdwg.mxu0
    %v948 = vsel %vm136, %v867, -inf
    %949 = vmax.xlane.f32.xlu0 %v948
    %v950 = vpop.xlane.xlu0 %949
    %v951 = vsel %vm136, %v945, -inf
    %952 = vmax.xlane.f32.xlu0 %v951
    %v953 = vpop.xlane.xlu0 %952
    %v954 = vsub.f32 %v867, %v950
    %v955 = vsub.f32 %v945, %v953
    %v956 = vmul.f32 %v954, 1.442695
    %v957 = vpow.pop %v956
    %v958 = vmul.f32 %v955, 1.442695
    %v959 = vpow.pop %v958
    %v960 = vsel %vm136, %v957, 0.0
    %961 = vadd.xlane.f32.xlu0 %v960
    %v962 = vpop.xlane.xlu0 %961
    %v963 = vsel %vm136, %v959, 0.0
    %964 = vadd.xlane.f32.xlu0 %v963
    %v965 = vpop.xlane.xlu0 %964
    %v966 = vrcp.pop %v962
    %v967 = vrcp.pop %v965
    %v968 = vmul.f32 %v957, %v966
    %v969 = vmul.f32 %v959, %v967
    %970 = vrot.lane.b32.xlu0 %v125, 48
    %v971 = vpop.permute.xlu0 %970
    %v974 = vsel %vm136, %v968, 0
    %976 = vmatprep.subr.mxu0 0.0
    %977 = vmatpush1.msra.mxu0 %v971
    %978 = vmatprep.subr.mxu0 0.0
    %979 = vmatpush1.msra.mxu0 0.0
    %980 = vmatprep.subr.mxu0 0.0
    %981 = vmatpush1.msra.mxu0 0.0
    %982 = vmatprep.subr.mxu0 0.0
    %983 = vmatpush1.msra.mxu0 0.0
    %984 = vmatprep.subr.mxu0 0.0
    %985 = vmatpush1.msra.mxu0 0.0
    %986 = vmatprep.subr.mxu0 0.0
    %987 = vmatpush1.msra.mxu0 0.0
    %988 = vmatprep.subr.mxu0 0.0
    %989 = vmatpush1.msra.mxu0 0.0
    %990 = vmatprep.subr.mxu0 0.0
    %991 = vmatpush1.msra.mxu0 0.0
    %992 = vmatprep.subr.mxu0 0.0
    %993 = vmatpush1.msra.mxu0 0.0
    %994 = vmatprep.subr.mxu0 0.0
    %995 = vmatpush1.msra.mxu0 0.0
    %996 = vmatprep.subr.mxu0 0.0
    %997 = vmatpush1.msra.mxu0 0.0
    %998 = vmatprep.subr.mxu0 0.0
    %999 = vmatpush1.msra.mxu0 0.0
    %1000 = vmatprep.subr.mxu0 0.0
    %1001 = vmatpush1.msra.mxu0 0.0
    %1002 = vmatprep.subr.mxu0 0.0
    %1003 = vmatpush1.msra.mxu0 0.0
    %1004 = vmatprep.subr.mxu0 0.0
    %1005 = vmatpush1.msra.mxu0 0.0
    %1006 = vmatprep.subr.mxu0 0.0
    %1007 = vmatpush1.msra.mxu0 0.0
    %1008 = vmatprep.subr.mxu0 0.0
    %1009 = vmatpush1.msra.mxu0 0.0
    %1010 = vmatprep.subr.mxu0 0.0
    %1011 = vmatpush1.msra.mxu0 0.0
    %1012 = vmatprep.subr.mxu0 0.0
    %1013 = vmatpush1.msra.mxu0 0.0
    %1014 = vmatprep.subr.mxu0 0.0
    %1015 = vmatpush1.msra.mxu0 0.0
    %1016 = vmatprep.subr.mxu0 0.0
    %1017 = vmatpush1.msra.mxu0 0.0
    %1018 = vmatprep.subr.mxu0 0.0
    %1019 = vmatpush1.msra.mxu0 0.0
    %1020 = vmatprep.subr.mxu0 0.0
    %1021 = vmatpush1.msra.mxu0 0.0
    %1022 = vmatprep.subr.mxu0 0.0
    %1023 = vmatpush1.msra.mxu0 0.0
    %1024 = vmatprep.subr.mxu0 0.0
    %1025 = vmatpush1.msra.mxu0 0.0
    %1026 = vmatprep.subr.mxu0 0.0
    %1027 = vmatpush1.msra.mxu0 0.0
    %1028 = vmatprep.subr.mxu0 0.0
    %1029 = vmatpush1.msra.mxu0 0.0
    %1030 = vmatprep.subr.mxu0 0.0
    %1031 = vmatpush1.msra.mxu0 0.0
    %1032 = vmatprep.subr.mxu0 0.0
    %1033 = vmatpush1.msra.mxu0 0.0
    %1034 = vmatprep.subr.mxu0 0.0
    %1035 = vmatpush1.msra.mxu0 0.0
    %1036 = vmatprep.subr.mxu0 0.0
    %1037 = vmatpush1.msra.mxu0 0.0
    %1038 = vmatprep.subr.mxu0 0.0
    %1039 = vmatpush1.msra.mxu0 0.0
    %1040 = vmatprep.mubr.f32.mxu0 0.0
    %1041 = vmatmul.mubr.f32.gmra.mrb[0].mxu0 %v974
    %v1042 = vpop.f32.mrb[0].mxu0
    %v1043 = vadd.f32 0.0, %v1042
    %v1044 = vpop.f32.mrb[0].mxu0
    %1045 = vdwg.mxu0
    %1046 = vrot.lane.b32.xlu0 %v130, 48
    %v1047 = vpop.permute.xlu0 %1046
    %v1050 = vsel %vm136, %v969, 0
    %1052 = vmatprep.subr.mxu0 0.0
    %1053 = vmatpush1.msra.mxu0 %v1047
    %1054 = vmatprep.subr.mxu0 0.0
    %1055 = vmatpush1.msra.mxu0 0.0
    %1056 = vmatprep.subr.mxu0 0.0
    %1057 = vmatpush1.msra.mxu0 0.0
    %1058 = vmatprep.subr.mxu0 0.0
    %1059 = vmatpush1.msra.mxu0 0.0
    %1060 = vmatprep.subr.mxu0 0.0
    %1061 = vmatpush1.msra.mxu0 0.0
    %1062 = vmatprep.subr.mxu0 0.0
    %1063 = vmatpush1.msra.mxu0 0.0
    %1064 = vmatprep.subr.mxu0 0.0
    %1065 = vmatpush1.msra.mxu0 0.0
    %1066 = vmatprep.subr.mxu0 0.0
    %1067 = vmatpush1.msra.mxu0 0.0
    %1068 = vmatprep.subr.mxu0 0.0
    %1069 = vmatpush1.msra.mxu0 0.0
    %1070 = vmatprep.subr.mxu0 0.0
    %1071 = vmatpush1.msra.mxu0 0.0
    %1072 = vmatprep.subr.mxu0 0.0
    %1073 = vmatpush1.msra.mxu0 0.0
    %1074 = vmatprep.subr.mxu0 0.0
    %1075 = vmatpush1.msra.mxu0 0.0
    %1076 = vmatprep.subr.mxu0 0.0
    %1077 = vmatpush1.msra.mxu0 0.0
    %1078 = vmatprep.subr.mxu0 0.0
    %1079 = vmatpush1.msra.mxu0 0.0
    %1080 = vmatprep.subr.mxu0 0.0
    %1081 = vmatpush1.msra.mxu0 0.0
    %1082 = vmatprep.subr.mxu0 0.0
    %1083 = vmatpush1.msra.mxu0 0.0
    %1084 = vmatprep.subr.mxu0 0.0
    %1085 = vmatpush1.msra.mxu0 0.0
    %1086 = vmatprep.subr.mxu0 0.0
    %1087 = vmatpush1.msra.mxu0 0.0
    %1088 = vmatprep.subr.mxu0 0.0
    %1089 = vmatpush1.msra.mxu0 0.0
    %1090 = vmatprep.subr.mxu0 0.0
    %1091 = vmatpush1.msra.mxu0 0.0
    %1092 = vmatprep.subr.mxu0 0.0
    %1093 = vmatpush1.msra.mxu0 0.0
    %1094 = vmatprep.subr.mxu0 0.0
    %1095 = vmatpush1.msra.mxu0 0.0
    %1096 = vmatprep.subr.mxu0 0.0
    %1097 = vmatpush1.msra.mxu0 0.0
    %1098 = vmatprep.subr.mxu0 0.0
    %1099 = vmatpush1.msra.mxu0 0.0
    %1100 = vmatprep.subr.mxu0 0.0
    %1101 = vmatpush1.msra.mxu0 0.0
    %1102 = vmatprep.subr.mxu0 0.0
    %1103 = vmatpush1.msra.mxu0 0.0
    %1104 = vmatprep.subr.mxu0 0.0
    %1105 = vmatpush1.msra.mxu0 0.0
    %1106 = vmatprep.subr.mxu0 0.0
    %1107 = vmatpush1.msra.mxu0 0.0
    %1108 = vmatprep.subr.mxu0 0.0
    %1109 = vmatpush1.msra.mxu0 0.0
    %1110 = vmatprep.subr.mxu0 0.0
    %1111 = vmatpush1.msra.mxu0 0.0
    %1112 = vmatprep.subr.mxu0 0.0
    %1113 = vmatpush1.msra.mxu0 0.0
    %1114 = vmatprep.subr.mxu0 0.0
    %1115 = vmatpush1.msra.mxu0 0.0
    %1116 = vmatprep.mubr.f32.mxu0 0.0
    %1117 = vmatmul.mubr.f32.gmra.mrb[0].mxu0 %v1050
    %v1118 = vpop.f32.mrb[0].mxu0
    %v1119 = vadd.f32 0.0, %v1118
    %v1120 = vpop.f32.mrb[0].mxu0
    %1121 = vdwg.mxu0
    %1122 = vrot.lane.b32.xlu0 %v125, 104
    %v1123 = vpop.permute.xlu0 %1122
    %1124 = vrot.lane.b32.xlu0 %v125, 72
    %v1125 = vpop.permute.xlu0 %1124
    %v1126 = vsel %vm136, %v1123, 0
    %v1128 = vsel %vm136, %v1125, 0
    %1130 = vmatprep.subr.mxu0 0.0
    %1131 = vmatpush1.xpose.msra.mxu0 %v1128
    %1132 = vmatprep.subr.mxu0 0.0
    %1133 = vmatpush1.xpose.msra.mxu0 0.0
    %1134 = vmatprep.subr.mxu0 0.0
    %1135 = vmatpush1.xpose.msra.mxu0 0.0
    %1136 = vmatprep.subr.mxu0 0.0
    %1137 = vmatpush1.xpose.msra.mxu0 0.0
    %1138 = vmatprep.subr.mxu0 0.0
    %1139 = vmatpush1.xpose.msra.mxu0 0.0
    %1140 = vmatprep.subr.mxu0 0.0
    %1141 = vmatpush1.xpose.msra.mxu0 0.0
    %1142 = vmatprep.subr.mxu0 0.0
    %1143 = vmatpush1.xpose.msra.mxu0 0.0
    %1144 = vmatprep.subr.mxu0 0.0
    %1145 = vmatpush1.xpose.msra.mxu0 0.0
    %1146 = vmatprep.subr.mxu0 0.0
    %1147 = vmatpush1.xpose.msra.mxu0 0.0
    %1148 = vmatprep.subr.mxu0 0.0
    %1149 = vmatpush1.xpose.msra.mxu0 0.0
    %1150 = vmatprep.subr.mxu0 0.0
    %1151 = vmatpush1.xpose.msra.mxu0 0.0
    %1152 = vmatprep.subr.mxu0 0.0
    %1153 = vmatpush1.xpose.msra.mxu0 0.0
    %1154 = vmatprep.subr.mxu0 0.0
    %1155 = vmatpush1.xpose.msra.mxu0 0.0
    %1156 = vmatprep.subr.mxu0 0.0
    %1157 = vmatpush1.xpose.msra.mxu0 0.0
    %1158 = vmatprep.subr.mxu0 0.0
    %1159 = vmatpush1.xpose.msra.mxu0 0.0
    %1160 = vmatprep.subr.mxu0 0.0
    %1161 = vmatpush1.xpose.msra.mxu0 0.0
    %1162 = vmatprep.subr.mxu0 0.0
    %1163 = vmatpush1.xpose.msra.mxu0 0.0
    %1164 = vmatprep.subr.mxu0 0.0
    %1165 = vmatpush1.xpose.msra.mxu0 0.0
    %1166 = vmatprep.subr.mxu0 0.0
    %1167 = vmatpush1.xpose.msra.mxu0 0.0
    %1168 = vmatprep.subr.mxu0 0.0
    %1169 = vmatpush1.xpose.msra.mxu0 0.0
    %1170 = vmatprep.subr.mxu0 0.0
    %1171 = vmatpush1.xpose.msra.mxu0 0.0
    %1172 = vmatprep.subr.mxu0 0.0
    %1173 = vmatpush1.xpose.msra.mxu0 0.0
    %1174 = vmatprep.subr.mxu0 0.0
    %1175 = vmatpush1.xpose.msra.mxu0 0.0
    %1176 = vmatprep.subr.mxu0 0.0
    %1177 = vmatpush1.xpose.msra.mxu0 0.0
    %1178 = vmatprep.subr.mxu0 0.0
    %1179 = vmatpush1.xpose.msra.mxu0 0.0
    %1180 = vmatprep.subr.mxu0 0.0
    %1181 = vmatpush1.xpose.msra.mxu0 0.0
    %1182 = vmatprep.subr.mxu0 0.0
    %1183 = vmatpush1.xpose.msra.mxu0 0.0
    %1184 = vmatprep.subr.mxu0 0.0
    %1185 = vmatpush1.xpose.msra.mxu0 0.0
    %1186 = vmatprep.subr.mxu0 0.0
    %1187 = vmatpush1.xpose.msra.mxu0 0.0
    %1188 = vmatprep.subr.mxu0 0.0
    %1189 = vmatpush1.xpose.msra.mxu0 0.0
    %1190 = vmatprep.subr.mxu0 0.0
    %1191 = vmatpush1.xpose.msra.mxu0 0.0
    %1192 = vmatprep.subr.mxu0 0.0
    %1193 = vmatpush1.xpose.msra.mxu0 0.0
    %1194 = vmatprep.mubr.f32.mxu0 0.0
    %1195 = vmatmul.mubr.f32.gmra.mrb[0].mxu0 %v1126
    %v1196 = vpop.f32.mrb[0].mxu0
    %v1197 = vadd.f32 0.0, %v1196
    %v1198 = vpop.f32.mrb[0].mxu0
    %1199 = vdwg.mxu0
    %1200 = vrot.lane.b32.xlu0 %v130, 104
    %v1201 = vpop.permute.xlu0 %1200
    %1202 = vrot.lane.b32.xlu0 %v130, 72
    %v1203 = vpop.permute.xlu0 %1202
    %v1204 = vsel %vm136, %v1201, 0
    %v1206 = vsel %vm136, %v1203, 0
    %1208 = vmatprep.subr.mxu0 0.0
    %1209 = vmatpush1.xpose.msra.mxu0 %v1206
    %1210 = vmatprep.subr.mxu0 0.0
    %1211 = vmatpush1.xpose.msra.mxu0 0.0
    %1212 = vmatprep.subr.mxu0 0.0
    %1213 = vmatpush1.xpose.msra.mxu0 0.0
    %1214 = vmatprep.subr.mxu0 0.0
    %1215 = vmatpush1.xpose.msra.mxu0 0.0
    %1216 = vmatprep.subr.mxu0 0.0
    %1217 = vmatpush1.xpose.msra.mxu0 0.0
    %1218 = vmatprep.subr.mxu0 0.0
    %1219 = vmatpush1.xpose.msra.mxu0 0.0
    %1220 = vmatprep.subr.mxu0 0.0
    %1221 = vmatpush1.xpose.msra.mxu0 0.0
    %1222 = vmatprep.subr.mxu0 0.0
    %1223 = vmatpush1.xpose.msra.mxu0 0.0
    %1224 = vmatprep.subr.mxu0 0.0
    %1225 = vmatpush1.xpose.msra.mxu0 0.0
    %1226 = vmatprep.subr.mxu0 0.0
    %1227 = vmatpush1.xpose.msra.mxu0 0.0
    %1228 = vmatprep.subr.mxu0 0.0
    %1229 = vmatpush1.xpose.msra.mxu0 0.0
    %1230 = vmatprep.subr.mxu0 0.0
    %1231 = vmatpush1.xpose.msra.mxu0 0.0
    %1232 = vmatprep.subr.mxu0 0.0
    %1233 = vmatpush1.xpose.msra.mxu0 0.0
    %1234 = vmatprep.subr.mxu0 0.0
    %1235 = vmatpush1.xpose.msra.mxu0 0.0
    %1236 = vmatprep.subr.mxu0 0.0
    %1237 = vmatpush1.xpose.msra.mxu0 0.0
    %1238 = vmatprep.subr.mxu0 0.0
    %1239 = vmatpush1.xpose.msra.mxu0 0.0
    %1240 = vmatprep.subr.mxu0 0.0
    %1241 = vmatpush1.xpose.msra.mxu0 0.0
    %1242 = vmatprep.subr.mxu0 0.0
    %1243 = vmatpush1.xpose.msra.mxu0 0.0
    %1244 = vmatprep.subr.mxu0 0.0
    %1245 = vmatpush1.xpose.msra.mxu0 0.0
    %1246 = vmatprep.subr.mxu0 0.0
    %1247 = vmatpush1.xpose.msra.mxu0 0.0
    %1248 = vmatprep.subr.mxu0 0.0
    %1249 = vmatpush1.xpose.msra.mxu0 0.0
    %1250 = vmatprep.subr.mxu0 0.0
    %1251 = vmatpush1.xpose.msra.mxu0 0.0
    %1252 = vmatprep.subr.mxu0 0.0
    %1253 = vmatpush1.xpose.msra.mxu0 0.0
    %1254 = vmatprep.subr.mxu0 0.0
    %1255 = vmatpush1.xpose.msra.mxu0 0.0
    %1256 = vmatprep.subr.mxu0 0.0
    %1257 = vmatpush1.xpose.msra.mxu0 0.0
    %1258 = vmatprep.subr.mxu0 0.0
    %1259 = vmatpush1.xpose.msra.mxu0 0.0
    %1260 = vmatprep.subr.mxu0 0.0
    %1261 = vmatpush1.xpose.msra.mxu0 0.0
    %1262 = vmatprep.subr.mxu0 0.0
    %1263 = vmatpush1.xpose.msra.mxu0 0.0
    %1264 = vmatprep.subr.mxu0 0.0
    %1265 = vmatpush1.xpose.msra.mxu0 0.0
    %1266 = vmatprep.subr.mxu0 0.0
    %1267 = vmatpush1.xpose.msra.mxu0 0.0
    %1268 = vmatprep.subr.mxu0 0.0
    %1269 = vmatpush1.xpose.msra.mxu0 0.0
    %1270 = vmatprep.subr.mxu0 0.0
    %1271 = vmatpush1.xpose.msra.mxu0 0.0
    %1272 = vmatprep.mubr.f32.mxu0 0.0
    %1273 = vmatmul.mubr.f32.gmra.mrb[0].mxu0 %v1204
    %v1274 = vpop.f32.mrb[0].mxu0
    %v1275 = vadd.f32 0.0, %v1274
    %v1276 = vpop.f32.mrb[0].mxu0
    %1277 = vdwg.mxu0
    %v1278 = vsel %vm136, %v1197, -inf
    %1279 = vmax.xlane.f32.xlu0 %v1278
    %v1280 = vpop.xlane.xlu0 %1279
    %v1281 = vsel %vm136, %v1275, -inf
    %1282 = vmax.xlane.f32.xlu0 %v1281
    %v1283 = vpop.xlane.xlu0 %1282
    %v1284 = vsub.f32 %v1197, %v1280
    %v1285 = vsub.f32 %v1275, %v1283
    %v1286 = vmul.f32 %v1284, 1.442695
    %v1287 = vpow.pop %v1286
    %v1288 = vmul.f32 %v1285, 1.442695
    %v1289 = vpow.pop %v1288
    %v1290 = vsel %vm136, %v1287, 0.0
    %1291 = vadd.xlane.f32.xlu0 %v1290
    %v1292 = vpop.xlane.xlu0 %1291
    %v1293 = vsel %vm136, %v1289, 0.0
    %1294 = vadd.xlane.f32.xlu0 %v1293
    %v1295 = vpop.xlane.xlu0 %1294
    %v1296 = vrcp.pop %v1292
    %v1297 = vrcp.pop %v1295
    %v1298 = vmul.f32 %v1287, %v1296
    %v1299 = vmul.f32 %v1289, %v1297
    %1300 = vrot.lane.b32.xlu0 %v125, 40
    %v1301 = vpop.permute.xlu0 %1300
    %v1304 = vsel %vm136, %v1298, 0
    %1306 = vmatprep.subr.mxu0 0.0
    %1307 = vmatpush1.msra.mxu0 %v1301
    %1308 = vmatprep.subr.mxu0 0.0
    %1309 = vmatpush1.msra.mxu0 0.0
    %1310 = vmatprep.subr.mxu0 0.0
    %1311 = vmatpush1.msra.mxu0 0.0
    %1312 = vmatprep.subr.mxu0 0.0
    %1313 = vmatpush1.msra.mxu0 0.0
    %1314 = vmatprep.subr.mxu0 0.0
    %1315 = vmatpush1.msra.mxu0 0.0
    %1316 = vmatprep.subr.mxu0 0.0
    %1317 = vmatpush1.msra.mxu0 0.0
    %1318 = vmatprep.subr.mxu0 0.0
    %1319 = vmatpush1.msra.mxu0 0.0
    %1320 = vmatprep.subr.mxu0 0.0
    %1321 = vmatpush1.msra.mxu0 0.0
    %1322 = vmatprep.subr.mxu0 0.0
    %1323 = vmatpush1.msra.mxu0 0.0
    %1324 = vmatprep.subr.mxu0 0.0
    %1325 = vmatpush1.msra.mxu0 0.0
    %1326 = vmatprep.subr.mxu0 0.0
    %1327 = vmatpush1.msra.mxu0 0.0
    %1328 = vmatprep.subr.mxu0 0.0
    %1329 = vmatpush1.msra.mxu0 0.0
    %1330 = vmatprep.subr.mxu0 0.0
    %1331 = vmatpush1.msra.mxu0 0.0
    %1332 = vmatprep.subr.mxu0 0.0
    %1333 = vmatpush1.msra.mxu0 0.0
    %1334 = vmatprep.subr.mxu0 0.0
    %1335 = vmatpush1.msra.mxu0 0.0
    %1336 = vmatprep.subr.mxu0 0.0
    %1337 = vmatpush1.msra.mxu0 0.0
    %1338 = vmatprep.subr.mxu0 0.0
    %1339 = vmatpush1.msra.mxu0 0.0
    %1340 = vmatprep.subr.mxu0 0.0
    %1341 = vmatpush1.msra.mxu0 0.0
    %1342 = vmatprep.subr.mxu0 0.0
    %1343 = vmatpush1.msra.mxu0 0.0
    %1344 = vmatprep.subr.mxu0 0.0
    %1345 = vmatpush1.msra.mxu0 0.0
    %1346 = vmatprep.subr.mxu0 0.0
    %1347 = vmatpush1.msra.mxu0 0.0
    %1348 = vmatprep.subr.mxu0 0.0
    %1349 = vmatpush1.msra.mxu0 0.0
    %1350 = vmatprep.subr.mxu0 0.0
    %1351 = vmatpush1.msra.mxu0 0.0
    %1352 = vmatprep.subr.mxu0 0.0
    %1353 = vmatpush1.msra.mxu0 0.0
    %1354 = vmatprep.subr.mxu0 0.0
    %1355 = vmatpush1.msra.mxu0 0.0
    %1356 = vmatprep.subr.mxu0 0.0
    %1357 = vmatpush1.msra.mxu0 0.0
    %1358 = vmatprep.subr.mxu0 0.0
    %1359 = vmatpush1.msra.mxu0 0.0
    %1360 = vmatprep.subr.mxu0 0.0
    %1361 = vmatpush1.msra.mxu0 0.0
    %1362 = vmatprep.subr.mxu0 0.0
    %1363 = vmatpush1.msra.mxu0 0.0
    %1364 = vmatprep.subr.mxu0 0.0
    %1365 = vmatpush1.msra.mxu0 0.0
    %1366 = vmatprep.subr.mxu0 0.0
    %1367 = vmatpush1.msra.mxu0 0.0
    %1368 = vmatprep.subr.mxu0 0.0
    %1369 = vmatpush1.msra.mxu0 0.0
    %1370 = vmatprep.mubr.f32.mxu0 0.0
    %1371 = vmatmul.mubr.f32.gmra.mrb[0].mxu0 %v1304
    %v1372 = vpop.f32.mrb[0].mxu0
    %v1373 = vadd.f32 0.0, %v1372
    %v1374 = vpop.f32.mrb[0].mxu0
    %1375 = vdwg.mxu0
    %1376 = vrot.lane.b32.xlu0 %v130, 40
    %v1377 = vpop.permute.xlu0 %1376
    %v1380 = vsel %vm136, %v1299, 0
    %1382 = vmatprep.subr.mxu0 0.0
    %1383 = vmatpush1.msra.mxu0 %v1377
    %1384 = vmatprep.subr.mxu0 0.0
    %1385 = vmatpush1.msra.mxu0 0.0
    %1386 = vmatprep.subr.mxu0 0.0
    %1387 = vmatpush1.msra.mxu0 0.0
    %1388 = vmatprep.subr.mxu0 0.0
    %1389 = vmatpush1.msra.mxu0 0.0
    %1390 = vmatprep.subr.mxu0 0.0
    %1391 = vmatpush1.msra.mxu0 0.0
    %1392 = vmatprep.subr.mxu0 0.0
    %1393 = vmatpush1.msra.mxu0 0.0
    %1394 = vmatprep.subr.mxu0 0.0
    %1395 = vmatpush1.msra.mxu0 0.0
    %1396 = vmatprep.subr.mxu0 0.0
    %1397 = vmatpush1.msra.mxu0 0.0
    %1398 = vmatprep.subr.mxu0 0.0
    %1399 = vmatpush1.msra.mxu0 0.0
    %1400 = vmatprep.subr.mxu0 0.0
    %1401 = vmatpush1.msra.mxu0 0.0
    %1402 = vmatprep.subr.mxu0 0.0
    %1403 = vmatpush1.msra.mxu0 0.0
    %1404 = vmatprep.subr.mxu0 0.0
    %1405 = vmatpush1.msra.mxu0 0.0
    %1406 = vmatprep.subr.mxu0 0.0
    %1407 = vmatpush1.msra.mxu0 0.0
    %1408 = vmatprep.subr.mxu0 0.0
    %1409 = vmatpush1.msra.mxu0 0.0
    %1410 = vmatprep.subr.mxu0 0.0
    %1411 = vmatpush1.msra.mxu0 0.0
    %1412 = vmatprep.subr.mxu0 0.0
    %1413 = vmatpush1.msra.mxu0 0.0
    %1414 = vmatprep.subr.mxu0 0.0
    %1415 = vmatpush1.msra.mxu0 0.0
    %1416 = vmatprep.subr.mxu0 0.0
    %1417 = vmatpush1.msra.mxu0 0.0
    %1418 = vmatprep.subr.mxu0 0.0
    %1419 = vmatpush1.msra.mxu0 0.0
    %1420 = vmatprep.subr.mxu0 0.0
    %1421 = vmatpush1.msra.mxu0 0.0
    %1422 = vmatprep.subr.mxu0 0.0
    %1423 = vmatpush1.msra.mxu0 0.0
    %1424 = vmatprep.subr.mxu0 0.0
    %1425 = vmatpush1.msra.mxu0 0.0
    %1426 = vmatprep.subr.mxu0 0.0
    %1427 = vmatpush1.msra.mxu0 0.0
    %1428 = vmatprep.subr.mxu0 0.0
    %1429 = vmatpush1.msra.mxu0 0.0
    %1430 = vmatprep.subr.mxu0 0.0
    %1431 = vmatpush1.msra.mxu0 0.0
    %1432 = vmatprep.subr.mxu0 0.0
    %1433 = vmatpush1.msra.mxu0 0.0
    %1434 = vmatprep.subr.mxu0 0.0
    %1435 = vmatpush1.msra.mxu0 0.0
    %1436 = vmatprep.subr.mxu0 0.0
    %1437 = vmatpush1.msra.mxu0 0.0
    %1438 = vmatprep.subr.mxu0 0.0
    %1439 = vmatpush1.msra.mxu0 0.0
    %1440 = vmatprep.subr.mxu0 0.0
    %1441 = vmatpush1.msra.mxu0 0.0
    %1442 = vmatprep.subr.mxu0 0.0
    %1443 = vmatpush1.msra.mxu0 0.0
    %1444 = vmatprep.subr.mxu0 0.0
    %1445 = vmatpush1.msra.mxu0 0.0
    %1446 = vmatprep.mubr.f32.mxu0 0.0
    %1447 = vmatmul.mubr.f32.gmra.mrb[0].mxu0 %v1380
    %v1448 = vpop.f32.mrb[0].mxu0
    %v1449 = vadd.f32 0.0, %v1448
    %v1450 = vpop.f32.mrb[0].mxu0
    %1451 = vdwg.mxu0
    %1454 = vrot.lane.b32.xlu0 %v713, 8
    %v1455 = vpop.permute.xlu0 %1454
    %1456 = vrot.lane.b32.xlu0 %v789, 8
    %v1457 = vpop.permute.xlu0 %1456
    %1462 = vrot.lane.b32.xlu0 %v1043, 16
    %v1463 = vpop.permute.xlu0 %1462
    %1464 = vrot.lane.b32.xlu0 %v1119, 16
    %v1465 = vpop.permute.xlu0 %1464
    %1470 = vrot.lane.b32.xlu0 %v1373, 24
    %v1471 = vpop.permute.xlu0 %1470
    %1472 = vrot.lane.b32.xlu0 %v1449, 24
    %v1473 = vpop.permute.xlu0 %1472
    %v1476 = vsel %vm136, %v383, %v1455
    %v1477 = vsel %vm136, %v459, %v1457
    %vm1478 = vcmask 130048
    %v1479 = vsel %vm1478, %v1476, %v1463
    %v1480 = vsel %vm1478, %v1477, %v1465
    %vm1481 = vcmask 195584
    %v1482 = vsel %vm1481, %v1479, %v1471
    %v1483 = vsel %vm1481, %v1480, %v1473
    %v1484 = vtanh.pop %v1482
    %v1485 = vtanh.pop %v1483
    %1486 = vst.msk [vmem:[#allocation7] sm:$0xff] %vm51, %v1484
    %1487 = vst.msk [vmem:[#allocation7 + $0x8] sm:$0xff] %vm51, %v1485
    // Predicated region
    $region18: #{tpu_custom_call.1} parent=1 // pred_check
      _
    $region19: #{tpu_custom_call.1} parent=1 // pred_check_branch
      %1489 = sbr.rel (0) target = $region21
    $region20: #{tpu_custom_call.1} parent=1 // pred_region
      %s1491 = ssub.s32 256, 256
      %1492 = vsyncadd [#allocation4], %s1491
      %s1493 = sshll.u32 [#allocation7], 4
      %s1494 = int_to_ptr.vmem [resolvable:$true] %s1493
      %1499 = dma.vmem_to_hbm [thread:$0]  %s1494, 256, %s2, [#allocation4], 128, 128, 8
    $region21: #{tpu_custom_call.1} parent=1 // pred_fallthru
      _
    // Predicated region
    $region22: #{tpu_custom_call.1} parent=1 // pred_check
      _
    $region23: #{tpu_custom_call.1} parent=1 // pred_check_branch
      %1501 = sbr.rel (0) target = $region25
    $region24: #{tpu_custom_call.1} parent=1 // pred_region
      %1502 = dma.done [#allocation4], 256
    $region25: #{tpu_custom_call.1} parent=1 // pred_fallthru
      _
    %1503 = vsyncpa [#allocation3], 1
    %1504 = vsyncpa [#allocation6], 1
    %1505 = vsyncpa [#allocation4], 1

</llo_original>
